<compile_context>
chip_gen: v7x
topology: tpu7x:2x2x1
jax: 0.10.0
libtpu: 0.0.40
codegen_flags: <defaults>
</compile_context>

<pallas_src>
import functools

import jax
import jax.numpy as jnp
from jax import lax
from jax.experimental import pallas as pl
from jax.experimental.pallas import tpu as pltpu


# ----------------------------------------------------------------------------
# BlockSpec helpers
# ----------------------------------------------------------------------------
def _vmem():
    """Whole-array operand resident in VMEM (no blocking / no pipelining)."""
    return pl.BlockSpec(memory_space=pltpu.MemorySpace.VMEM)


def _ep_spec(*dims):
    """Per-episode block: leading (episode) dim indexed by the grid, rest full."""
    nd = len(dims)
    return pl.BlockSpec((1,) + tuple(dims), lambda b: (b,) + (0,) * nd)


# ----------------------------------------------------------------------------
# In-kernel math shared by the fused kernel(s)
# ----------------------------------------------------------------------------
def _support_backward(x_spt, m2_sel, adj_sel, onehot, h1, m1t_bf, w1, wc, bc):
    """Analytic grads of the mean support cross-entropy wrt (W0, W1, Wc, bc).

    x_spt   (m, D) f32   support encodings Z2[ids] = (A[ids] @ H1) @ W1
    m2_sel  (m, H) f32   A[ids] @ H1
    adj_sel (m, N) f32   A[ids, :]
    onehot  (m, C) f32   one-hot support labels
    h1      (N, H) f32   relu(M1 @ W0)   (relu mask)
    m1t_bf  (F, N) bf16  (A @ X)^T, precomputed (no in-kernel transpose)
    w1 (H, D) f32, wc (D, C) f32, bc (1, C) f32
    """
    m = x_spt.shape[0]
    logits = jnp.dot(x_spt, wc, preferred_element_type=jnp.float32) + bc
    logits = logits - jnp.max(logits, axis=-1, keepdims=True)
    ez = jnp.exp(logits)
    probs = ez / jnp.sum(ez, axis=-1, keepdims=True)
    dlogits = (probs - onehot) * (1.0 / m)                       # mean CE
    tt = (((0,), (0,)), ((), ()))                                # "A^T @ B"
    dwc = lax.dot_general(x_spt, dlogits, tt,
                          preferred_element_type=jnp.float32)    # (D, C)
    dbc = jnp.sum(dlogits, axis=0, keepdims=True)                # (1, C)
    dx = lax.dot_general(dlogits, wc, (((1,), (1,)), ((), ())),
                         preferred_element_type=jnp.float32)     # (m, D)
    dw1 = lax.dot_general(m2_sel, dx, tt,
                          preferred_element_type=jnp.float32)    # (H, D)
    dm2 = lax.dot_general(dx, w1, (((1,), (1,)), ((), ())),
                          preferred_element_type=jnp.float32)    # (m, H)
    dh1 = lax.dot_general(adj_sel, dm2, tt,
                          preferred_element_type=jnp.float32)    # (N, H)
    dz1 = jnp.where(h1 > 0.0, dh1, 0.0)
    dw0 = jnp.dot(m1t_bf, dz1.astype(jnp.bfloat16),
                  preferred_element_type=jnp.float32)            # (F, H)
    return dw0, dw1, dwc, dbc


# ----------------------------------------------------------------------------
# Pallas kernels
# ----------------------------------------------------------------------------
def _fused_step_kernel(m1_ref, m1t_ref,                      # shared, bf16
                       w0_ref, w1_ref, wc_ref, bc_ref,       # per-episode
                       adjsel_ref, oh_ref,                   # per-episode
                       dw0_ref, dw1_ref, dwc_ref, dbc_ref):
    """One MAML inner step: GCN forward + support-set backward, fully in VMEM.

    The only full-size intermediate is H1 = relu(M1 @ W0); it lives in
    VMEM/vregs and is never written to HBM.  Only the four gradients come out.
    """
    h1 = jnp.maximum(
        jnp.dot(m1_ref[...], w0_ref[0], preferred_element_type=jnp.float32),
        0.0)                                                            # (N, H)
    m2_sel = jnp.dot(adjsel_ref[0], h1,
                     preferred_element_type=jnp.float32)                # (m, H)
    x_spt = jnp.dot(m2_sel, w1_ref[0],
                    preferred_element_type=jnp.float32)                 # (m, D)
    dw0, dw1, dwc, dbc = _support_backward(
        x_spt, m2_sel, adjsel_ref[0], oh_ref[0],
        h1, m1t_ref[...], w1_ref[0], wc_ref[0], bc_ref[0])
    dw0_ref[0] = dw0
    dw1_ref[0] = dw1
    dwc_ref[0] = dwc
    dbc_ref[0] = dbc


def _query_enc_kernel(m1_ref, w0_ref, w1_ref, adjq_ref, xq_ref):
    """Final per-episode forward: only the query-node encodings are produced."""
    h1 = jnp.maximum(
        jnp.dot(m1_ref[...], w0_ref[0], preferred_element_type=jnp.float32),
        0.0)                                                            # (N, H)
    m2q = jnp.dot(adjq_ref[0], h1, preferred_element_type=jnp.float32)  # (q, H)
    xq_ref[0] = jnp.dot(m2q, w1_ref[0],
                        preferred_element_type=jnp.float32)             # (q, D)


# ----------------------------------------------------------------------------
# pallas_call wrappers
# ----------------------------------------------------------------------------
def fused_step(m1_bf, m1t_bf, w0b_bf, w1b, wcb, bcb, adj_sel, oh_spt):
    """Batched (over episodes) fused GCN forward + support backward."""
    B, Fd, H = w0b_bf.shape
    D = w1b.shape[2]
    C = wcb.shape[2]
    m, N = adj_sel.shape[1], adj_sel.shape[2]
    return pl.pallas_call(
        _fused_step_kernel,
        out_shape=(jax.ShapeDtypeStruct((B, Fd, H), jnp.float32),
                   jax.ShapeDtypeStruct((B, H, D), jnp.float32),
                   jax.ShapeDtypeStruct((B, D, C), jnp.float32),
                   jax.ShapeDtypeStruct((B, 1, C), jnp.float32)),
        grid=(B,),
        in_specs=[_vmem(), _vmem(),
                  _ep_spec(Fd, H), _ep_spec(H, D), _ep_spec(D, C),
                  _ep_spec(1, C), _ep_spec(m, N), _ep_spec(m, C)],
        out_specs=(_ep_spec(Fd, H), _ep_spec(H, D),
                   _ep_spec(D, C), _ep_spec(1, C)),
        compiler_params=pltpu.CompilerParams(
            dimension_semantics=("parallel",)),
    )(m1_bf, m1t_bf, w0b_bf, w1b, wcb, bcb, adj_sel, oh_spt)


def query_encodings(m1_bf, w0b_bf, w1b, adj_q):
    """Batched (over episodes) query-node encodings with the final weights."""
    B, Fd, H = w0b_bf.shape
    D = w1b.shape[2]
    q, N = adj_q.shape[1], adj_q.shape[2]
    return pl.pallas_call(
        _query_enc_kernel,
        out_shape=jax.ShapeDtypeStruct((B, q, D), jnp.float32),
        grid=(B,),
        in_specs=[_vmem(), _ep_spec(Fd, H), _ep_spec(H, D), _ep_spec(q, N)],
        out_specs=_ep_spec(q, D),
        compiler_params=pltpu.CompilerParams(
            dimension_semantics=("parallel",)),
    )(m1_bf, w0b_bf, w1b, adj_q)


# ----------------------------------------------------------------------------
# UnsupMAML.forward (loss / accuracy computation)
# ----------------------------------------------------------------------------
def unsup_maml_forward(params, features, adj, id_spt, y_spt, id_query, y_query,
                       *, inner_lr, num_steps_meta, n_way):
    W0, W1, Wc, bc = params
    B = id_spt.shape[0]
    C = n_way
    f32, bf16 = jnp.float32, jnp.bfloat16

    adj = adj.astype(f32)

    # -- hoisted weight-independent precompute (computed exactly once) --------
    M1 = jnp.dot(adj, features.astype(f32), preferred_element_type=f32)  # A @ X
    M1_bf = M1.astype(bf16)
    M1T_bf = M1.T.astype(bf16)         # for dW0 = M1^T @ dZ1 (no per-step .T)

    # -- per-episode constants (support/query ids & labels fixed across steps) -
    adj_sel = adj[id_spt]                                   # (B, m, N) = A[ids,:]
    adj_q = adj[id_query]                                   # (B, q, N)
    oh_spt = jax.nn.one_hot(y_spt, C, dtype=f32)            # (B, m, C)
    bc2d = bc.reshape(1, C).astype(f32)

    # -- batched (over episodes) inner-loop state: start from the meta params --
    w0b = jnp.broadcast_to(W0.astype(f32)[None], (B,) + W0.shape)
    w1b = jnp.broadcast_to(W1.astype(f32)[None], (B,) + W1.shape)
    wcb = jnp.broadcast_to(Wc.astype(f32)[None], (B,) + Wc.shape)
    bcb = jnp.broadcast_to(bc2d[None], (B, 1, C))

    # -- inner loop: one fused forward+backward Pallas kernel per step --------
    # (the base step is the first iteration: forward with the meta parameters
    #  and grads w.r.t. the meta parameters, exactly as in the reference)
    for _ in range(num_steps_meta):
        dw0, dw1, dwc, dbc = fused_step(M1_bf, M1T_bf,
                                        w0b.astype(bf16), w1b, wcb, bcb,
                                        adj_sel, oh_spt)
        w0b = w0b - inner_lr * dw0
        w1b = w1b - inner_lr * dw1
        wcb = wcb - inner_lr * dwc
        bcb = bcb - inner_lr * dbc

    # -- final forward (query encodings only) + query metrics -----------------
    # NOTE: query metrics for steps 0..num_steps_meta-1 never reach the return
    # values of the reference forward(), so they are not computed at all.
    xq = query_encodings(M1_bf, w0b.astype(bf16), w1b, adj_q)      # (B, q, D)
    logits_q = jnp.einsum('bqd,bdc->bqc', xq, wcb) + bcb           # (B, q, C)
    logp = jax.nn.log_softmax(logits_q, axis=-1)
    oh_q = jax.nn.one_hot(y_query, C, dtype=f32)
    loss_q = -jnp.mean(jnp.sum(oh_q * logp, axis=-1), axis=-1)     # per episode
    final_loss_query = jnp.sum(loss_q) / B
    pred = jnp.argmax(logits_q, axis=-1)                           # softmax argmax
    correct = jnp.sum((pred == y_query).astype(jnp.int32))
    final_acc = correct.astype(f32) / float(id_query.shape[1] * B)
    # TODO(synk): meta_optimizer.zero_grad()/backward()/step() (the Adam
    # meta-update side effect of forward()) is training logic, not replicated.
    return final_loss_query, final_acc


# ----------------------------------------------------------------------------
# Driver
# ----------------------------------------------------------------------------
if __name__ == "__main__":
    # Small, TPU-friendly shapes implied by the module; D_LATENT = 128 keeps
    # every Pallas block lane-dense.  (On v6e/v7x the 256-wide MXU would prefer
    # HIDDEN = D_LATENT = 256 if the hyper-parameters were negotiable.)
    N_NODES, F_IN, HIDDEN, D_LATENT = 256, 128, 128, 128
    N_WAY, K_SHOT, Q_QUERY = 4, 2, 3
    META_BATCH_SIZE, NUM_STEPS_META, INNER_LR = 2, 3, 0.01

    key = jax.random.PRNGKey(0)
    (k_feat, k_adj, k_w0, k_w1, k_wc,
     k_spt, k_qry, k_ys, k_yq) = jax.random.split(key, 9)

    f32, bf16 = jnp.float32, jnp.bfloat16

    # Data.features / Data.adj (dense, symmetrically normalized, self loops)
    features = jax.random.normal(k_feat, (N_NODES, F_IN), f32)
    a = (jax.random.uniform(k_adj, (N_NODES, N_NODES)) < 0.05).astype(f32)
    a = jnp.maximum(a, a.T) + jnp.eye(N_NODES, dtype=f32)
    dinv = 1.0 / jnp.sqrt(jnp.sum(a, axis=1))
    adj = a * dinv[:, None] * dinv[None, :]

    # GNNEncoder (2-layer GCN) + LinearClassifier parameters
    W0 = jax.random.normal(k_w0, (F_IN, HIDDEN), f32) / jnp.sqrt(F_IN)
    W1 = jax.random.normal(k_w1, (HIDDEN, D_LATENT), f32) / jnp.sqrt(HIDDEN)
    Wc = jax.random.normal(k_wc, (D_LATENT, N_WAY), f32) / jnp.sqrt(D_LATENT)
    bc = jnp.zeros((N_WAY,), f32)
    params = (W0, W1, Wc, bc)

    # episodic task indices / labels
    id_spt = jax.random.randint(k_spt, (META_BATCH_SIZE, N_WAY * K_SHOT),
                                0, N_NODES, dtype=jnp.int32)
    id_query = jax.random.randint(k_qry, (META_BATCH_SIZE, N_WAY * Q_QUERY),
                                  0, N_NODES, dtype=jnp.int32)
    y_spt = jax.random.randint(k_ys, (META_BATCH_SIZE, N_WAY * K_SHOT),
                               0, N_WAY, dtype=jnp.int32)
    y_query = jax.random.randint(k_yq, (META_BATCH_SIZE, N_WAY * Q_QUERY),
                                 0, N_WAY, dtype=jnp.int32)

    # ---- correctness check: fused step kernel (forward + support backward)
    # ---- against a pure-jnp reference that uses the same bf16/f32 arithmetic.
    M1 = jnp.dot(adj, features)
    adj_sel = adj[id_spt]
    oh_spt = jax.nn.one_hot(y_spt, N_WAY, dtype=f32)
    bc2d = bc.reshape(1, N_WAY)
    B = META_BATCH_SIZE
    w0b0 = jnp.broadcast_to(W0[None], (B,) + W0.shape)
    w1b0 = jnp.broadcast_to(W1[None], (B,) + W1.shape)
    wcb0 = jnp.broadcast_to(Wc[None], (B,) + Wc.shape)
    bcb0 = jnp.broadcast_to(bc2d[None], (B, 1, N_WAY))
    g_pl = fused_step(M1.astype(bf16), M1.T.astype(bf16),
                      w0b0.astype(bf16), w1b0, wcb0, bcb0, adj_sel, oh_spt)

    def _ref_step(adjs, oh):
        h1 = jnp.maximum(jnp.dot(M1.astype(bf16), W0.astype(bf16),
                                 preferred_element_type=f32), 0.0)
        m2s = adjs @ h1
        x = m2s @ W1
        p = jax.nn.softmax(x @ Wc + bc2d, axis=-1)
        dlog = (p - oh) / x.shape[0]
        dwc = x.T @ dlog
        dbc_ = jnp.sum(dlog, axis=0, keepdims=True)
        dx = dlog @ Wc.T
        dw1 = m2s.T @ dx
        dm2 = dx @ W1.T
        dh1 = adjs.T @ dm2
        dz1 = jnp.where(h1 > 0.0, dh1, 0.0)
        dw0 = jnp.dot(M1.T.astype(bf16), dz1.astype(bf16),
                      preferred_element_type=f32)
        return dw0, dw1, dwc, dbc_

    g_ref = jax.vmap(_ref_step)(adj_sel, oh_spt)
    for gp, gr in zip(g_pl, g_ref):
        assert jnp.allclose(gp, gr, rtol=5e-2, atol=5e-3), gp.shape

    # ---- full UnsupMAML.forward under a single jit ---------------------------
    forward_fn = jax.jit(functools.partial(
        unsup_maml_forward, inner_lr=INNER_LR,
        num_steps_meta=NUM_STEPS_META, n_way=N_WAY))
    final_loss, final_acc = forward_fn(params, features, adj, id_spt, y_spt,
                                       id_query, y_query)
    final_loss = jax.block_until_ready(final_loss)
    final_acc = jax.block_until_ready(final_acc)
    assert jnp.isfinite(final_loss) and jnp.isfinite(final_acc)
    print("KERNEL_OK")
</pallas_src>

<mosaic_0001>
module attributes {stable_mosaic.version = 11 : i64} {
  func.func @_fused_step_kernel(%arg0: i32, %arg1: memref<256x128xbf16, #tpu.memory_space<vmem>>, %arg2: memref<128x256xbf16, #tpu.memory_space<vmem>>, %arg3: memref<1x128x128xbf16, #tpu.memory_space<vmem>>, %arg4: memref<1x128x128xf32, #tpu.memory_space<vmem>>, %arg5: memref<1x128x4xf32, #tpu.memory_space<vmem>>, %arg6: memref<1x1x4xf32, #tpu.memory_space<vmem>>, %arg7: memref<1x8x256xf32, #tpu.memory_space<vmem>>, %arg8: memref<1x8x4xf32, #tpu.memory_space<vmem>>, %arg9: memref<1x128x128xf32, #tpu.memory_space<vmem>>, %arg10: memref<1x128x128xf32, #tpu.memory_space<vmem>>, %arg11: memref<1x128x4xf32, #tpu.memory_space<vmem>>, %arg12: memref<1x1x4xf32, #tpu.memory_space<vmem>>) attributes {dimension_semantics = [#tpu.dimension_semantics<parallel>], iteration_bounds = array<i64: 2>, scalar_prefetch = 0 : i64, scratch_operands = 0 : i64, tpu.core_type = #tpu.core_type<tc>, window_params = [{pipeline_mode = #tpu.pipeline_mode<synchronous>, transform_indices = @transform_0, window_bounds = array<i64: 256, 128>}, {pipeline_mode = #tpu.pipeline_mode<synchronous>, transform_indices = @transform_1, window_bounds = array<i64: 128, 256>}, {transform_indices = @transform_2, window_bounds = array<i64: 1, 128, 128>}, {transform_indices = @transform_3, window_bounds = array<i64: 1, 128, 128>}, {transform_indices = @transform_4, window_bounds = array<i64: 1, 128, 4>}, {transform_indices = @transform_5, window_bounds = array<i64: 1, 1, 4>}, {transform_indices = @transform_6, window_bounds = array<i64: 1, 8, 256>}, {transform_indices = @transform_7, window_bounds = array<i64: 1, 8, 4>}, {transform_indices = @transform_8, window_bounds = array<i64: 1, 128, 128>}, {transform_indices = @transform_9, window_bounds = array<i64: 1, 128, 128>}, {transform_indices = @transform_10, window_bounds = array<i64: 1, 128, 4>}, {transform_indices = @transform_11, window_bounds = array<i64: 1, 1, 4>}]} {
    %c0 = arith.constant 0 : index
    %c0_0 = arith.constant 0 : index
    %0 = vector.load %arg1[%c0, %c0_0] : memref<256x128xbf16, #tpu.memory_space<vmem>>, vector<256x128xbf16>
    %c0_1 = arith.constant 0 : index
    %c0_2 = arith.constant 0 : index
    %c0_3 = arith.constant 0 : index
    %1 = vector.load %arg3[%c0_1, %c0_2, %c0_3] : memref<1x128x128xbf16, #tpu.memory_space<vmem>>, vector<1x128x128xbf16>
    %2 = vector.shape_cast %1 : vector<1x128x128xbf16> to vector<128x128xbf16>
    %cst = arith.constant dense<0.000000e+00> : vector<256x128xf32>
    %3 = tpu.matmul %0, %2, %cst {dimension_numbers = #tpu.dot_dimension_numbers<[1], [0], [0], [1], [0, 0, 1, 1], [], []>} : vector<256x128xbf16>, vector<128x128xbf16>, vector<256x128xf32> -> vector<256x128xf32>
    %cst_4 = arith.constant 0.000000e+00 : f32
    %4 = vector.broadcast %cst_4 : f32 to vector<256x128xf32>
    %5 = arith.maximumf %3, %4 : vector<256x128xf32>
    %c0_5 = arith.constant 0 : index
    %c0_6 = arith.constant 0 : index
    %c0_7 = arith.constant 0 : index
    %6 = vector.load %arg7[%c0_5, %c0_6, %c0_7] : memref<1x8x256xf32, #tpu.memory_space<vmem>>, vector<1x8x256xf32>
    %7 = vector.shape_cast %6 : vector<1x8x256xf32> to vector<8x256xf32>
    %cst_8 = arith.constant dense<0.000000e+00> : vector<8x128xf32>
    %8 = tpu.matmul %7, %5, %cst_8 {dimension_numbers = #tpu.dot_dimension_numbers<[1], [0], [0], [1], [0, 0, 1, 1], [], []>} : vector<8x256xf32>, vector<256x128xf32>, vector<8x128xf32> -> vector<8x128xf32>
    %c0_9 = arith.constant 0 : index
    %c0_10 = arith.constant 0 : index
    %c0_11 = arith.constant 0 : index
    %9 = vector.load %arg4[%c0_9, %c0_10, %c0_11] : memref<1x128x128xf32, #tpu.memory_space<vmem>>, vector<1x128x128xf32>
    %10 = vector.shape_cast %9 : vector<1x128x128xf32> to vector<128x128xf32>
    %cst_12 = arith.constant dense<0.000000e+00> : vector<8x128xf32>
    %11 = tpu.matmul %8, %10, %cst_12 {dimension_numbers = #tpu.dot_dimension_numbers<[1], [0], [0], [1], [0, 0, 1, 1], [], []>} : vector<8x128xf32>, vector<128x128xf32>, vector<8x128xf32> -> vector<8x128xf32>
    %c0_13 = arith.constant 0 : index
    %c0_14 = arith.constant 0 : index
    %c0_15 = arith.constant 0 : index
    %12 = vector.load %arg7[%c0_13, %c0_14, %c0_15] : memref<1x8x256xf32, #tpu.memory_space<vmem>>, vector<1x8x256xf32>
    %13 = vector.shape_cast %12 : vector<1x8x256xf32> to vector<8x256xf32>
    %c0_16 = arith.constant 0 : index
    %c0_17 = arith.constant 0 : index
    %c0_18 = arith.constant 0 : index
    %14 = vector.load %arg8[%c0_16, %c0_17, %c0_18] : memref<1x8x4xf32, #tpu.memory_space<vmem>>, vector<1x8x4xf32>
    %15 = vector.shape_cast %14 : vector<1x8x4xf32> to vector<8x4xf32>
    %c0_19 = arith.constant 0 : index
    %c0_20 = arith.constant 0 : index
    %16 = vector.load %arg2[%c0_19, %c0_20] : memref<128x256xbf16, #tpu.memory_space<vmem>>, vector<128x256xbf16>
    %c0_21 = arith.constant 0 : index
    %c0_22 = arith.constant 0 : index
    %c0_23 = arith.constant 0 : index
    %17 = vector.load %arg4[%c0_21, %c0_22, %c0_23] : memref<1x128x128xf32, #tpu.memory_space<vmem>>, vector<1x128x128xf32>
    %18 = vector.shape_cast %17 : vector<1x128x128xf32> to vector<128x128xf32>
    %c0_24 = arith.constant 0 : index
    %c0_25 = arith.constant 0 : index
    %c0_26 = arith.constant 0 : index
    %19 = vector.load %arg5[%c0_24, %c0_25, %c0_26] : memref<1x128x4xf32, #tpu.memory_space<vmem>>, vector<1x128x4xf32>
    %20 = vector.shape_cast %19 : vector<1x128x4xf32> to vector<128x4xf32>
    %c0_27 = arith.constant 0 : index
    %c0_28 = arith.constant 0 : index
    %c0_29 = arith.constant 0 : index
    %21 = vector.load %arg6[%c0_27, %c0_28, %c0_29] : memref<1x1x4xf32, #tpu.memory_space<vmem>>, vector<1x1x4xf32>
    %22 = vector.shape_cast %21 : vector<1x1x4xf32> to vector<1x4xf32>
    %cst_30 = arith.constant dense<0.000000e+00> : vector<8x4xf32>
    %23 = tpu.matmul %11, %20, %cst_30 {dimension_numbers = #tpu.dot_dimension_numbers<[1], [0], [0], [1], [0, 0, 1, 1], [], []>} : vector<8x128xf32>, vector<128x4xf32>, vector<8x4xf32> -> vector<8x4xf32>
    %24 = vector.broadcast %22 : vector<1x4xf32> to vector<8x4xf32>
    %25 = arith.addf %23, %24 : vector<8x4xf32>
    %cst_31 = arith.constant dense<0xFF800000> : vector<8xf32>
    %26 = vector.multi_reduction <maximumf>, %25, %cst_31 [1] : vector<8x4xf32> to vector<8xf32>
    %27 = vector.shape_cast %26 : vector<8xf32> to vector<8x1xf32>
    %28 = vector.broadcast %27 : vector<8x1xf32> to vector<8x4xf32>
    %29 = arith.subf %25, %28 : vector<8x4xf32>
    %30 = math.exp %29 : vector<8x4xf32>
    %cst_32 = arith.constant dense<0.000000e+00> : vector<8xf32>
    %31 = vector.multi_reduction <add>, %30, %cst_32 [1] : vector<8x4xf32> to vector<8xf32>
    %32 = vector.shape_cast %31 : vector<8xf32> to vector<8x1xf32>
    %33 = vector.broadcast %32 : vector<8x1xf32> to vector<8x4xf32>
    %34 = arith.divf %30, %33 : vector<8x4xf32>
    %35 = arith.subf %34, %15 : vector<8x4xf32>
    %cst_33 = arith.constant 1.250000e-01 : f32
    %36 = vector.broadcast %cst_33 : f32 to vector<8x4xf32>
    %37 = arith.mulf %35, %36 : vector<8x4xf32>
    %cst_34 = arith.constant dense<0.000000e+00> : vector<128x4xf32>
    %38 = tpu.matmul %11, %37, %cst_34 {dimension_numbers = #tpu.dot_dimension_numbers<[0], [0], [1], [1], [0, 1, 1, 1], [], []>} : vector<8x128xf32>, vector<8x4xf32>, vector<128x4xf32> -> vector<128x4xf32>
    %cst_35 = arith.constant dense<0.000000e+00> : vector<4xf32>
    %39 = vector.multi_reduction <add>, %37, %cst_35 [0] : vector<8x4xf32> to vector<4xf32>
    %40 = vector.shape_cast %39 : vector<4xf32> to vector<1x4xf32>
    %cst_36 = arith.constant dense<0.000000e+00> : vector<8x128xf32>
    %41 = tpu.matmul %37, %20, %cst_36 {dimension_numbers = #tpu.dot_dimension_numbers<[1], [1], [0], [0], [0, 0, 1, 0], [], []>} : vector<8x4xf32>, vector<128x4xf32>, vector<8x128xf32> -> vector<8x128xf32>
    %cst_37 = arith.constant dense<0.000000e+00> : vector<128x128xf32>
    %42 = tpu.matmul %8, %41, %cst_37 {dimension_numbers = #tpu.dot_dimension_numbers<[0], [0], [1], [1], [0, 1, 1, 1], [], []>} : vector<8x128xf32>, vector<8x128xf32>, vector<128x128xf32> -> vector<128x128xf32>
    %cst_38 = arith.constant dense<0.000000e+00> : vector<8x128xf32>
    %43 = tpu.matmul %41, %18, %cst_38 {dimension_numbers = #tpu.dot_dimension_numbers<[1], [1], [0], [0], [0, 0, 1, 0], [], []>} : vector<8x128xf32>, vector<128x128xf32>, vector<8x128xf32> -> vector<8x128xf32>
    %cst_39 = arith.constant dense<0.000000e+00> : vector<256x128xf32>
    %44 = tpu.matmul %13, %43, %cst_39 {dimension_numbers = #tpu.dot_dimension_numbers<[0], [0], [1], [1], [0, 1, 1, 1], [], []>} : vector<8x256xf32>, vector<8x128xf32>, vector<256x128xf32> -> vector<256x128xf32>
    %cst_40 = arith.constant 0.000000e+00 : f32
    %45 = vector.broadcast %cst_40 : f32 to vector<256x128xf32>
    %46 = arith.cmpf ogt, %5, %45 : vector<256x128xf32>
    %cst_41 = arith.constant 0.000000e+00 : f32
    %47 = vector.broadcast %cst_41 : f32 to vector<256x128xf32>
    %48 = arith.select %46, %44, %47 : vector<256x128xi1>, vector<256x128xf32>
    %49 = arith.truncf %48 : vector<256x128xf32> to vector<256x128xbf16>
    %cst_42 = arith.constant dense<0.000000e+00> : vector<128x128xf32>
    %50 = tpu.matmul %16, %49, %cst_42 {dimension_numbers = #tpu.dot_dimension_numbers<[1], [0], [0], [1], [0, 0, 1, 1], [], []>} : vector<128x256xbf16>, vector<256x128xbf16>, vector<128x128xf32> -> vector<128x128xf32>
    %c0_43 = arith.constant 0 : index
    %c0_44 = arith.constant 0 : index
    %c0_45 = arith.constant 0 : index
    %51 = vector.load %arg9[%c0_43, %c0_44, %c0_45] : memref<1x128x128xf32, #tpu.memory_space<vmem>>, vector<1x128x128xf32>
    %52 = vector.shape_cast %51 : vector<1x128x128xf32> to vector<128x128xf32>
    %53 = vector.shape_cast %50 : vector<128x128xf32> to vector<1x128x128xf32>
    tpu.vector_store %arg9[%c0_43, %c0_44, %c0_45], %53 {strides = array<i32>} : memref<1x128x128xf32, #tpu.memory_space<vmem>>, vector<1x128x128xf32>,
    %c0_46 = arith.constant 0 : index
    %c0_47 = arith.constant 0 : index
    %c0_48 = arith.constant 0 : index
    %54 = vector.load %arg10[%c0_46, %c0_47, %c0_48] : memref<1x128x128xf32, #tpu.memory_space<vmem>>, vector<1x128x128xf32>
    %55 = vector.shape_cast %54 : vector<1x128x128xf32> to vector<128x128xf32>
    %56 = vector.shape_cast %42 : vector<128x128xf32> to vector<1x128x128xf32>
    tpu.vector_store %arg10[%c0_46, %c0_47, %c0_48], %56 {strides = array<i32>} : memref<1x128x128xf32, #tpu.memory_space<vmem>>, vector<1x128x128xf32>,
    %c0_49 = arith.constant 0 : index
    %c0_50 = arith.constant 0 : index
    %c0_51 = arith.constant 0 : index
    %57 = vector.load %arg11[%c0_49, %c0_50, %c0_51] : memref<1x128x4xf32, #tpu.memory_space<vmem>>, vector<1x128x4xf32>
    %58 = vector.shape_cast %57 : vector<1x128x4xf32> to vector<128x4xf32>
    %59 = vector.shape_cast %38 : vector<128x4xf32> to vector<1x128x4xf32>
    tpu.vector_store %arg11[%c0_49, %c0_50, %c0_51], %59 {strides = array<i32>} : memref<1x128x4xf32, #tpu.memory_space<vmem>>, vector<1x128x4xf32>,
    %c0_52 = arith.constant 0 : index
    %c0_53 = arith.constant 0 : index
    %c0_54 = arith.constant 0 : index
    %60 = vector.load %arg12[%c0_52, %c0_53, %c0_54] : memref<1x1x4xf32, #tpu.memory_space<vmem>>, vector<1x1x4xf32>
    %61 = vector.shape_cast %60 : vector<1x1x4xf32> to vector<1x4xf32>
    %62 = vector.shape_cast %40 : vector<1x4xf32> to vector<1x1x4xf32>
    tpu.vector_store %arg12[%c0_52, %c0_53, %c0_54], %62 {strides = array<i32>} : memref<1x1x4xf32, #tpu.memory_space<vmem>>, vector<1x1x4xf32>,
    return
  }
  func.func @transform_0(%arg0: i32) -> (i32, i32) {
    %c0_i32 = arith.constant 0 : i32
    %c0_i32_0 = arith.constant 0 : i32
    %c0_i32_1 = arith.constant 0 : i32
    return %c0_i32, %c0_i32_0 : i32, i32
  }
  func.func @transform_1(%arg0: i32) -> (i32, i32) {
    %c0_i32 = arith.constant 0 : i32
    %c0_i32_0 = arith.constant 0 : i32
    %c0_i32_1 = arith.constant 0 : i32
    return %c0_i32, %c0_i32_0 : i32, i32
  }
  func.func @transform_2(%arg0: i32) -> (i32, i32, i32) {
    %c0_i32 = arith.constant 0 : i32
    %c0_i32_0 = arith.constant 0 : i32
    %c0_i32_1 = arith.constant 0 : i32
    return %arg0, %c0_i32, %c0_i32_0 : i32, i32, i32
  }
  func.func @transform_3(%arg0: i32) -> (i32, i32, i32) {
    %c0_i32 = arith.constant 0 : i32
    %c0_i32_0 = arith.constant 0 : i32
    %c0_i32_1 = arith.constant 0 : i32
    return %arg0, %c0_i32, %c0_i32_0 : i32, i32, i32
  }
  func.func @transform_4(%arg0: i32) -> (i32, i32, i32) {
    %c0_i32 = arith.constant 0 : i32
    %c0_i32_0 = arith.constant 0 : i32
    %c0_i32_1 = arith.constant 0 : i32
    return %arg0, %c0_i32, %c0_i32_0 : i32, i32, i32
  }
  func.func @transform_5(%arg0: i32) -> (i32, i32, i32) {
    %c0_i32 = arith.constant 0 : i32
    %c0_i32_0 = arith.constant 0 : i32
    %c0_i32_1 = arith.constant 0 : i32
    return %arg0, %c0_i32, %c0_i32_0 : i32, i32, i32
  }
  func.func @transform_6(%arg0: i32) -> (i32, i32, i32) {
    %c0_i32 = arith.constant 0 : i32
    %c0_i32_0 = arith.constant 0 : i32
    %c0_i32_1 = arith.constant 0 : i32
    return %arg0, %c0_i32, %c0_i32_0 : i32, i32, i32
  }
  func.func @transform_7(%arg0: i32) -> (i32, i32, i32) {
    %c0_i32 = arith.constant 0 : i32
    %c0_i32_0 = arith.constant 0 : i32
    %c0_i32_1 = arith.constant 0 : i32
    return %arg0, %c0_i32, %c0_i32_0 : i32, i32, i32
  }
  func.func @transform_8(%arg0: i32) -> (i32, i32, i32) {
    %c0_i32 = arith.constant 0 : i32
    %c0_i32_0 = arith.constant 0 : i32
    %c0_i32_1 = arith.constant 0 : i32
    return %arg0, %c0_i32, %c0_i32_0 : i32, i32, i32
  }
  func.func @transform_9(%arg0: i32) -> (i32, i32, i32) {
    %c0_i32 = arith.constant 0 : i32
    %c0_i32_0 = arith.constant 0 : i32
    %c0_i32_1 = arith.constant 0 : i32
    return %arg0, %c0_i32, %c0_i32_0 : i32, i32, i32
  }
  func.func @transform_10(%arg0: i32) -> (i32, i32, i32) {
    %c0_i32 = arith.constant 0 : i32
    %c0_i32_0 = arith.constant 0 : i32
    %c0_i32_1 = arith.constant 0 : i32
    return %arg0, %c0_i32, %c0_i32_0 : i32, i32, i32
  }
  func.func @transform_11(%arg0: i32) -> (i32, i32, i32) {
    %c0_i32 = arith.constant 0 : i32
    %c0_i32_0 = arith.constant 0 : i32
    %c0_i32_1 = arith.constant 0 : i32
    return %arg0, %c0_i32, %c0_i32_0 : i32, i32, i32
  }
}

</mosaic_0001>

<llo_original>
// kernel: tpu_custom_call.1
$region0: #{tpu_custom_call.1}
  #allocation0 [shape = 'u32[]', space=smem, size = 0x4, offset = 0x4, fixed_abs, tag = 'smem constant byte address 0x4 - core index']
  #allocation1 [shape = 'u32[144,128]{1,0:T(1,128)}', space=vmem, size = 0x12000, scoped, tag = 'internal scratch']
  %s0 = inlined_call_operand.hbm [shape: bf16[256,128], index: 0, kind: input, shape index: {}]
  %s1 = inlined_call_operand.hbm [shape: bf16[128,256], index: 1, kind: input, shape index: {}]
  %s2 = inlined_call_operand.hbm [shape: bf16[2,128,128], index: 2, kind: input, shape index: {}]
  %s3 = inlined_call_operand.vmem [shape: f32[2,128,128], index: 3, kind: input, shape index: {}]
  %s4 = inlined_call_operand.vmem [shape: f32[2,128,4], index: 4, kind: input, shape index: {}]
  %s5 = inlined_call_operand.vmem [shape: f32[2,1,4], index: 5, kind: input, shape index: {}]
  %s6 = inlined_call_operand.vmem [shape: f32[2,8,256], index: 6, kind: input, shape index: {}]
  %s7 = inlined_call_operand.vmem [shape: f32[2,8,4], index: 7, kind: input, shape index: {}]
  %s8 = inlined_call_operand.hbm [shape: f32[2,128,128], index: 8, kind: output, shape index: {0}]
  %s9 = inlined_call_operand.hbm [shape: f32[2,128,128], index: 9, kind: output, shape index: {1}]
  %s10 = inlined_call_operand.vmem [shape: f32[2,128,4], index: 10, kind: output, shape index: {2}]
  %s11 = inlined_call_operand.hbm [shape: f32[2,1,4], index: 11, kind: output, shape index: {3}]
  %12 = xla_tuple %s8, %s9, %s10, %s11
  %s13 = sld [smem:[#allocation0]]
  $region101: #{tpu_custom_call.1} parent=0
    _
  %s15 = ssub.s32 1, %s13
  %s16 = scalar_select 0, %s15, %s13
  $region1: #{tpu_custom_call.1} parent=0
    #allocation2 [shape = 'u8[65536]{0}', space=vmem, size = 0x10000, scoped, tag = 'input window, operand 0, single buffered']
    #allocation3 [shape = 's32[2]{0}', space=sflag, size = 0x8, scoped, tag = 'scoped memory for tpu_custom_call.1']
    #allocation4 [shape = 's32[2]{0}', space=sflag, size = 0x8, scoped, tag = 'scoped memory for tpu_custom_call.1']
    #allocation5 [shape = 'u8[65536]{0}', space=vmem, size = 0x10000, scoped, tag = 'input window, operand 1, single buffered']
    #allocation6 [shape = 's32[1]{0}', space=sflag, size = 0x4, scoped, tag = 'scoped memory for tpu_custom_call.1']
    #allocation7 [shape = 'u8[65536]{0}', space=vmem, size = 0x10000, scoped, tag = 'input window, operand 2']
    #allocation8 [shape = 'u8[131072]{0}', space=vmem, size = 0x20000, scoped, tag = 'output window, operand 0']
    #allocation9 [shape = 'u8[131072]{0}', space=vmem, size = 0x20000, scoped, tag = 'output window, operand 1']
    #allocation10 [shape = 's32[2]{0}', space=sflag, size = 0x8, scoped, tag = 'scoped memory for tpu_custom_call.1']
    #allocation11 [shape = 'u8[1024]{0}', space=vmem, size = 0x400, scoped, tag = 'output window, operand 3']
    %17 = vsyncpa [#allocation3], 0
    %18 = vsyncpa [#allocation6], 0
    %19 = vsyncpa [#allocation4], 0
    %s20 = scalar_lea.sflag [#allocation4], 1
    %21 = vsyncpa %s20, 0
    %22 = vsyncpa [#allocation10], 0
    %s23 = scalar_lea.sflag [#allocation10], 1
    %24 = vsyncpa %s23, 0
    loop: start=0, step=1, limit=4
    $region2: #{tpu_custom_call.1} parent=1 // loop_pre_header
      _
    $region3: #{tpu_custom_call.1} parent=1 // loop_header
      %s26 = sphi 0, %s30
      %p27 = scmp.ge.s32.totalorder %s26, 4
      %s34 = sphi 0, %s34
      %s36 = sphi 0, %s34
      %s37 = sphi 0, %s36
      %s51 = sphi 0, %s37
      %s55 = sphi 0, %s55
      %s57 = sphi 0, %s55
      %s58 = sphi 0, %s57
      %s72 = sphi 0, %s58
      %s78 = sphi 0, %s80
      %s81 = sphi 0, %s78
      %s82 = sphi 0, %s81
      %s98 = sphi 0, %s82
      %s104 = sphi 0, %s106
      %s107 = sphi 0, %s104
      %s108 = sphi 0, %s107
      %s124 = sphi 0, %s108
      %s130 = sphi 0, %s132
      %s133 = sphi 0, %s130
      %s134 = sphi 0, %s133
      %s150 = sphi 0, %s134
      %s156 = sphi 0, %s158
      %s159 = sphi 0, %s156
      %s160 = sphi 0, %s159
      %s176 = sphi 0, %s160
      %s182 = sphi 0, %s184
      %s185 = sphi 0, %s182
      %s186 = sphi 0, %s185
      %s202 = sphi 0, %s186
      %s208 = sphi 0, %s210
      %s211 = sphi 0, %s208
      %s212 = sphi 0, %s211
      %s228 = sphi 0, %s212
      %s234 = sphi 0, %s236
      %s237 = sphi 0, %s234
      %s238 = sphi 0, %s237
      %s254 = sphi 0, %s238
      %s260 = sphi 0, %s262
      %s263 = sphi 0, %s260
      %s264 = sphi 0, %s263
      %s280 = sphi 0, %s264
      %s286 = sphi 0, %s288
      %s289 = sphi 0, %s286
      %s290 = sphi 0, %s289
      %s306 = sphi 0, %s290
      %s312 = sphi 0, %s314
      %s315 = sphi 0, %s312
      %s316 = sphi 0, %s315
      %s332 = sphi 0, %s316
    $region4: #{tpu_custom_call.1} parent=1 // loop_header_branch
      %29 = sbr.rel (%p27) target = $region8
    $region5: #{tpu_custom_call.1} parent=1 // loop_body
      %s31 = ssub.s32 %s26, 1
      %s32 = ssub.s32 %s26, 2
      %s33 = sadd.s32 %s26, 1
      %s35 = sadd.s32 %s34, 1
      %p38 = scmp.eq.s32.totalorder %s26, 1
      %p39 = scmp.ne.s32.totalorder %s34, %s36
      %p40 = scmp.eq.s32.totalorder %s26, 0
      %p41 = por %p39, %p40
      %p42 = scmp.ne.s32.totalorder %s34, %s36
      %p43 = scmp.eq.s32.totalorder %s31, 1
      %p44 = por %p42, %p43
      %p45 = scmp.ne.s32.totalorder %s36, %s37
      %p46 = scmp.eq.s32.totalorder %s31, 0
      %p47 = por %p45, %p46
      %p48 = scmp.ne.s32.totalorder %s36, %s37
      %p49 = scmp.eq.s32.totalorder %s32, 1
      %p50 = por %p48, %p49
      %p52 = scmp.ne.s32.totalorder %s37, %s51
      %p53 = scmp.eq.s32.totalorder %s32, 0
      %p54 = por %p52, %p53
      %s56 = sadd.s32 %s55, 1
      %p59 = scmp.eq.s32.totalorder %s26, 1
      %p60 = scmp.ne.s32.totalorder %s55, %s57
      %p61 = scmp.eq.s32.totalorder %s26, 0
      %p62 = por %p60, %p61
      %p63 = scmp.ne.s32.totalorder %s55, %s57
      %p64 = scmp.eq.s32.totalorder %s31, 1
      %p65 = por %p63, %p64
      %p66 = scmp.ne.s32.totalorder %s57, %s58
      %p67 = scmp.eq.s32.totalorder %s31, 0
      %p68 = por %p66, %p67
      %p69 = scmp.ne.s32.totalorder %s57, %s58
      %p70 = scmp.eq.s32.totalorder %s32, 1
      %p71 = por %p69, %p70
      %p73 = scmp.ne.s32.totalorder %s58, %s72
      %p74 = scmp.eq.s32.totalorder %s32, 0
      %p75 = por %p73, %p74
      %s76 = ssub.s32 %s26, %s33
      %p77 = scmp.eq.s32.totalorder %s76, 0
      %s79 = sadd.s32 %s78, 1
      %s80 = scalar_select %p77, %s78, %s79
      %p83 = pneg %p77
      %p84 = scmp.eq.s32.totalorder %s26, 1
      %p85 = por %p83, %p84
      %p86 = scmp.ne.s32.totalorder %s78, %s81
      %p87 = scmp.eq.s32.totalorder %s26, 0
      %p88 = por %p86, %p87
      %p89 = scmp.ne.s32.totalorder %s78, %s81
      %p90 = scmp.eq.s32.totalorder %s31, 1
      %p91 = por %p89, %p90
      %p92 = scmp.ne.s32.totalorder %s81, %s82
      %p93 = scmp.eq.s32.totalorder %s31, 0
      %p94 = por %p92, %p93
      %p95 = scmp.ne.s32.totalorder %s81, %s82
      %p96 = scmp.eq.s32.totalorder %s32, 1
      %p97 = por %p95, %p96
      %p99 = scmp.ne.s32.totalorder %s82, %s98
      %p100 = scmp.eq.s32.totalorder %s32, 0
      %p101 = por %p99, %p100
      %s102 = ssub.s32 %s26, %s33
      %p103 = scmp.eq.s32.totalorder %s102, 0
      %s105 = sadd.s32 %s104, 1
      %s106 = scalar_select %p103, %s104, %s105
      %p109 = pneg %p103
      %p110 = scmp.eq.s32.totalorder %s26, 1
      %p111 = por %p109, %p110
      %p112 = scmp.ne.s32.totalorder %s104, %s107
      %p113 = scmp.eq.s32.totalorder %s26, 0
      %p114 = por %p112, %p113
      %p115 = scmp.ne.s32.totalorder %s104, %s107
      %p116 = scmp.eq.s32.totalorder %s31, 1
      %p117 = por %p115, %p116
      %p118 = scmp.ne.s32.totalorder %s107, %s108
      %p119 = scmp.eq.s32.totalorder %s31, 0
      %p120 = por %p118, %p119
      %p121 = scmp.ne.s32.totalorder %s107, %s108
      %p122 = scmp.eq.s32.totalorder %s32, 1
      %p123 = por %p121, %p122
      %p125 = scmp.ne.s32.totalorder %s108, %s124
      %p126 = scmp.eq.s32.totalorder %s32, 0
      %p127 = por %p125, %p126
      %s128 = ssub.s32 %s26, %s33
      %p129 = scmp.eq.s32.totalorder %s128, 0
      %s131 = sadd.s32 %s130, 1
      %s132 = scalar_select %p129, %s130, %s131
      %p135 = pneg %p129
      %p136 = scmp.eq.s32.totalorder %s26, 1
      %p137 = por %p135, %p136
      %p138 = scmp.ne.s32.totalorder %s130, %s133
      %p139 = scmp.eq.s32.totalorder %s26, 0
      %p140 = por %p138, %p139
      %p141 = scmp.ne.s32.totalorder %s130, %s133
      %p142 = scmp.eq.s32.totalorder %s31, 1
      %p143 = por %p141, %p142
      %p144 = scmp.ne.s32.totalorder %s133, %s134
      %p145 = scmp.eq.s32.totalorder %s31, 0
      %p146 = por %p144, %p145
      %p147 = scmp.ne.s32.totalorder %s133, %s134
      %p148 = scmp.eq.s32.totalorder %s32, 1
      %p149 = por %p147, %p148
      %p151 = scmp.ne.s32.totalorder %s134, %s150
      %p152 = scmp.eq.s32.totalorder %s32, 0
      %p153 = por %p151, %p152
      %s154 = ssub.s32 %s26, %s33
      %p155 = scmp.eq.s32.totalorder %s154, 0
      %s157 = sadd.s32 %s156, 1
      %s158 = scalar_select %p155, %s156, %s157
      %p161 = pneg %p155
      %p162 = scmp.eq.s32.totalorder %s26, 1
      %p163 = por %p161, %p162
      %p164 = scmp.ne.s32.totalorder %s156, %s159
      %p165 = scmp.eq.s32.totalorder %s26, 0
      %p166 = por %p164, %p165
      %p167 = scmp.ne.s32.totalorder %s156, %s159
      %p168 = scmp.eq.s32.totalorder %s31, 1
      %p169 = por %p167, %p168
      %p170 = scmp.ne.s32.totalorder %s159, %s160
      %p171 = scmp.eq.s32.totalorder %s31, 0
      %p172 = por %p170, %p171
      %p173 = scmp.ne.s32.totalorder %s159, %s160
      %p174 = scmp.eq.s32.totalorder %s32, 1
      %p175 = por %p173, %p174
      %p177 = scmp.ne.s32.totalorder %s160, %s176
      %p178 = scmp.eq.s32.totalorder %s32, 0
      %p179 = por %p177, %p178
      %s180 = ssub.s32 %s26, %s33
      %p181 = scmp.eq.s32.totalorder %s180, 0
      %s183 = sadd.s32 %s182, 1
      %s184 = scalar_select %p181, %s182, %s183
      %p187 = pneg %p181
      %p188 = scmp.eq.s32.totalorder %s26, 1
      %p189 = por %p187, %p188
      %p190 = scmp.ne.s32.totalorder %s182, %s185
      %p191 = scmp.eq.s32.totalorder %s26, 0
      %p192 = por %p190, %p191
      %p193 = scmp.ne.s32.totalorder %s182, %s185
      %p194 = scmp.eq.s32.totalorder %s31, 1
      %p195 = por %p193, %p194
      %p196 = scmp.ne.s32.totalorder %s185, %s186
      %p197 = scmp.eq.s32.totalorder %s31, 0
      %p198 = por %p196, %p197
      %p199 = scmp.ne.s32.totalorder %s185, %s186
      %p200 = scmp.eq.s32.totalorder %s32, 1
      %p201 = por %p199, %p200
      %p203 = scmp.ne.s32.totalorder %s186, %s202
      %p204 = scmp.eq.s32.totalorder %s32, 0
      %p205 = por %p203, %p204
      %s206 = ssub.s32 %s26, %s33
      %p207 = scmp.eq.s32.totalorder %s206, 0
      %s209 = sadd.s32 %s208, 1
      %s210 = scalar_select %p207, %s208, %s209
      %p213 = pneg %p207
      %p214 = scmp.eq.s32.totalorder %s26, 1
      %p215 = por %p213, %p214
      %p216 = scmp.ne.s32.totalorder %s208, %s211
      %p217 = scmp.eq.s32.totalorder %s26, 0
      %p218 = por %p216, %p217
      %p219 = scmp.ne.s32.totalorder %s208, %s211
      %p220 = scmp.eq.s32.totalorder %s31, 1
      %p221 = por %p219, %p220
      %p222 = scmp.ne.s32.totalorder %s211, %s212
      %p223 = scmp.eq.s32.totalorder %s31, 0
      %p224 = por %p222, %p223
      %p225 = scmp.ne.s32.totalorder %s211, %s212
      %p226 = scmp.eq.s32.totalorder %s32, 1
      %p227 = por %p225, %p226
      %p229 = scmp.ne.s32.totalorder %s212, %s228
      %p230 = scmp.eq.s32.totalorder %s32, 0
      %p231 = por %p229, %p230
      %s232 = ssub.s32 %s26, %s33
      %p233 = scmp.eq.s32.totalorder %s232, 0
      %s235 = sadd.s32 %s234, 1
      %s236 = scalar_select %p233, %s234, %s235
      %p239 = pneg %p233
      %p240 = scmp.eq.s32.totalorder %s26, 1
      %p241 = por %p239, %p240
      %p242 = scmp.ne.s32.totalorder %s234, %s237
      %p243 = scmp.eq.s32.totalorder %s26, 0
      %p244 = por %p242, %p243
      %p245 = scmp.ne.s32.totalorder %s234, %s237
      %p246 = scmp.eq.s32.totalorder %s31, 1
      %p247 = por %p245, %p246
      %p248 = scmp.ne.s32.totalorder %s237, %s238
      %p249 = scmp.eq.s32.totalorder %s31, 0
      %p250 = por %p248, %p249
      %p251 = scmp.ne.s32.totalorder %s237, %s238
      %p252 = scmp.eq.s32.totalorder %s32, 1
      %p253 = por %p251, %p252
      %p255 = scmp.ne.s32.totalorder %s238, %s254
      %p256 = scmp.eq.s32.totalorder %s32, 0
      %p257 = por %p255, %p256
      %s258 = ssub.s32 %s26, %s33
      %p259 = scmp.eq.s32.totalorder %s258, 0
      %s261 = sadd.s32 %s260, 1
      %s262 = scalar_select %p259, %s260, %s261
      %p265 = pneg %p259
      %p266 = scmp.eq.s32.totalorder %s26, 1
      %p267 = por %p265, %p266
      %p268 = scmp.ne.s32.totalorder %s260, %s263
      %p269 = scmp.eq.s32.totalorder %s26, 0
      %p270 = por %p268, %p269
      %p271 = scmp.ne.s32.totalorder %s260, %s263
      %p272 = scmp.eq.s32.totalorder %s31, 1
      %p273 = por %p271, %p272
      %p274 = scmp.ne.s32.totalorder %s263, %s264
      %p275 = scmp.eq.s32.totalorder %s31, 0
      %p276 = por %p274, %p275
      %p277 = scmp.ne.s32.totalorder %s263, %s264
      %p278 = scmp.eq.s32.totalorder %s32, 1
      %p279 = por %p277, %p278
      %p281 = scmp.ne.s32.totalorder %s264, %s280
      %p282 = scmp.eq.s32.totalorder %s32, 0
      %p283 = por %p281, %p282
      %s284 = ssub.s32 %s26, %s33
      %p285 = scmp.eq.s32.totalorder %s284, 0
      %s287 = sadd.s32 %s286, 1
      %s288 = scalar_select %p285, %s286, %s287
      %p291 = pneg %p285
      %p292 = scmp.eq.s32.totalorder %s26, 1
      %p293 = por %p291, %p292
      %p294 = scmp.ne.s32.totalorder %s286, %s289
      %p295 = scmp.eq.s32.totalorder %s26, 0
      %p296 = por %p294, %p295
      %p297 = scmp.ne.s32.totalorder %s286, %s289
      %p298 = scmp.eq.s32.totalorder %s31, 1
      %p299 = por %p297, %p298
      %p300 = scmp.ne.s32.totalorder %s289, %s290
      %p301 = scmp.eq.s32.totalorder %s31, 0
      %p302 = por %p300, %p301
      %p303 = scmp.ne.s32.totalorder %s289, %s290
      %p304 = scmp.eq.s32.totalorder %s32, 1
      %p305 = por %p303, %p304
      %p307 = scmp.ne.s32.totalorder %s290, %s306
      %p308 = scmp.eq.s32.totalorder %s32, 0
      %p309 = por %p307, %p308
      %s310 = ssub.s32 %s26, %s33
      %p311 = scmp.eq.s32.totalorder %s310, 0
      %s313 = sadd.s32 %s312, 1
      %s314 = scalar_select %p311, %s312, %s313
      %p317 = pneg %p311
      %p318 = scmp.eq.s32.totalorder %s26, 1
      %p319 = por %p317, %p318
      %p320 = scmp.ne.s32.totalorder %s312, %s315
      %p321 = scmp.eq.s32.totalorder %s26, 0
      %p322 = por %p320, %p321
      %p323 = scmp.ne.s32.totalorder %s312, %s315
      %p324 = scmp.eq.s32.totalorder %s31, 1
      %p325 = por %p323, %p324
      %p326 = scmp.ne.s32.totalorder %s315, %s316
      %p327 = scmp.eq.s32.totalorder %s31, 0
      %p328 = por %p326, %p327
      %p329 = scmp.ne.s32.totalorder %s315, %s316
      %p330 = scmp.eq.s32.totalorder %s32, 1
      %p331 = por %p329, %p330
      %p333 = scmp.ne.s32.totalorder %s316, %s332
      %p334 = scmp.eq.s32.totalorder %s32, 0
      %p335 = por %p333, %p334
      %p336 = scmp.le.s32.totalorder 1, %s26
      %p337 = scmp.lt.s32.totalorder %s26, 3
      %p338 = pnand %p336, %p337
      %p339 = pneg %p338
      // Predicated region
      $region9: #{tpu_custom_call.1} parent=5 // pred_check
        _
      $region10: #{tpu_custom_call.1} parent=5 // pred_check_branch
        %341 = sbr.rel (%p338) target = $region12
      $region11: #{tpu_custom_call.1} parent=5 // pred_region
        %s342 = ssub.s32 %s26, 1
        // Predicated region
        $region13: #{tpu_custom_call.1} parent=11 // pred_check
          %p343 = pneg %p47
        $region14: #{tpu_custom_call.1} parent=11 // pred_check_branch
          %345 = sbr.rel (%p343) target = $region16
        $region15: #{tpu_custom_call.1} parent=11 // pred_region
          %s347 = ssub.s32 2048, 2048
          %348 = vsyncadd [#allocation3], %s347
          %s349 = sshll.u32 [#allocation2], 4
          %s350 = int_to_ptr.vmem [resolvable:$true] %s349
          %355 = dma.hbm_to_vmem [thread:$0]  %s0, 2048, %s350, [#allocation3], 64, 64, 4
        $region16: #{tpu_custom_call.1} parent=11 // pred_fallthru
          _
        // Predicated region
        $region17: #{tpu_custom_call.1} parent=11 // pred_check
          %p356 = pneg %p68
        $region18: #{tpu_custom_call.1} parent=11 // pred_check_branch
          %358 = sbr.rel (%p356) target = $region20
        $region19: #{tpu_custom_call.1} parent=11 // pred_region
          %s360 = ssub.s32 2048, 2048
          %361 = vsyncadd [#allocation6], %s360
          %s362 = sshll.u32 [#allocation5], 4
          %s363 = int_to_ptr.vmem [resolvable:$true] %s362
          %368 = dma.hbm_to_vmem [thread:$0]  %s1, 2048, %s363, [#allocation6], 128, 128, 8
        $region20: #{tpu_custom_call.1} parent=11 // pred_fallthru
          _
      $region12: #{tpu_custom_call.1} parent=5 // pred_fallthru
        _
      %p369 = scmp.lt.s32.totalorder %s26, 2
      // Predicated region
      $region21: #{tpu_custom_call.1} parent=5 // pred_check
        %p370 = pneg %p369
      $region22: #{tpu_custom_call.1} parent=5 // pred_check_branch
        %372 = sbr.rel (%p370) target = $region24
      $region23: #{tpu_custom_call.1} parent=5 // pred_region
        // Predicated region
        $region25: #{tpu_custom_call.1} parent=23 // pred_check
          %p373 = pneg %p88
        $region26: #{tpu_custom_call.1} parent=23 // pred_check_branch
          %375 = sbr.rel (%p373) target = $region28
        $region27: #{tpu_custom_call.1} parent=23 // pred_region
          %s376 = sand.u32 %s26, 1
          %s377 = scalar_lea.sflag [#allocation3], %s376
          %s378 = sand.u32 %s78, 1
          %s379 = smul.addr %s378, 64
          %s380 = scalar_lea.vmem [#allocation7], %s379
          %s382 = ssub.s32 1024, 1024
          %383 = vsyncadd %s377, %s382
          %s384 = smul.addr %s26, 16
          %s385 = smul.addr %s384, 64
          %s386 = scalar_lea.hbm %s2, %s385
          %s387 = sshll.u32 %s380, 4
          %s388 = int_to_ptr.vmem [resolvable:$true] %s387
          %393 = dma.hbm_to_vmem [thread:$0]  %s386, 1024, %s388, %s377, 64, 64, 4
        $region28: #{tpu_custom_call.1} parent=23 // pred_fallthru
          _
        // Predicated region
        $region29: #{tpu_custom_call.1} parent=23 // pred_check
          %p394 = pneg %p114
        $region30: #{tpu_custom_call.1} parent=23 // pred_check_branch
          %396 = sbr.rel (%p394) target = $region32
        $region31: #{tpu_custom_call.1} parent=23 // pred_region
          %p397 = scmp.lt.s32.totalorder %s26, 1
          %s398 = scalar_select %p397, %s26, 1
          %s399 = smul.addr %s398, 16
          %s400 = smul.addr %s399, 8
          %s401 = scalar_lea.vmem %s3, %s400
        $region32: #{tpu_custom_call.1} parent=23 // pred_fallthru
          _
        // Predicated region
        $region33: #{tpu_custom_call.1} parent=23 // pred_check
          %p402 = pneg %p140
        $region34: #{tpu_custom_call.1} parent=23 // pred_check_branch
          %404 = sbr.rel (%p402) target = $region36
        $region35: #{tpu_custom_call.1} parent=23 // pred_region
          %p405 = scmp.lt.s32.totalorder %s26, 1
          %s406 = scalar_select %p405, %s26, 1
          %s407 = smul.addr %s406, 16
          %s408 = smul.addr %s407, 8
          %s409 = scalar_lea.vmem %s4, %s408
        $region36: #{tpu_custom_call.1} parent=23 // pred_fallthru
          _
        // Predicated region
        $region37: #{tpu_custom_call.1} parent=23 // pred_check
          %p410 = pneg %p166
        $region38: #{tpu_custom_call.1} parent=23 // pred_check_branch
          %412 = sbr.rel (%p410) target = $region40
        $region39: #{tpu_custom_call.1} parent=23 // pred_region
          %p413 = scmp.lt.s32.totalorder %s26, 1
          %s414 = scalar_select %p413, %s26, 1
          %s415 = scalar_lea.vmem %s5, %s414
        $region40: #{tpu_custom_call.1} parent=23 // pred_fallthru
          _
        // Predicated region
        $region41: #{tpu_custom_call.1} parent=23 // pred_check
          %p416 = pneg %p192
        $region42: #{tpu_custom_call.1} parent=23 // pred_check_branch
          %418 = sbr.rel (%p416) target = $region44
        $region43: #{tpu_custom_call.1} parent=23 // pred_region
          %p419 = scmp.lt.s32.totalorder %s26, 1
          %s420 = scalar_select %p419, %s26, 1
          %s421 = smul.addr %s420, 2
          %s422 = smul.addr %s421, 8
          %s423 = scalar_lea.vmem %s6, %s422
        $region44: #{tpu_custom_call.1} parent=23 // pred_fallthru
          _
        // Predicated region
        $region45: #{tpu_custom_call.1} parent=23 // pred_check
          %p424 = pneg %p218
        $region46: #{tpu_custom_call.1} parent=23 // pred_check_branch
          %426 = sbr.rel (%p424) target = $region48
        $region47: #{tpu_custom_call.1} parent=23 // pred_region
          %p427 = scmp.lt.s32.totalorder %s26, 1
          %s428 = scalar_select %p427, %s26, 1
          %s429 = smul.addr %s428, 8
          %s430 = scalar_lea.vmem %s7, %s429
        $region48: #{tpu_custom_call.1} parent=23 // pred_fallthru
          _
      $region24: #{tpu_custom_call.1} parent=5 // pred_fallthru
        _
      %p431 = scmp.le.s32.totalorder 1, %s26
      %p432 = scmp.lt.s32.totalorder %s26, 3
      %p433 = pnand %p431, %p432
      %p434 = pneg %p433
      // Predicated region
      $region49: #{tpu_custom_call.1} parent=5 // pred_check
        _
      $region50: #{tpu_custom_call.1} parent=5 // pred_check_branch
        %436 = sbr.rel (%p433) target = $region52
      $region51: #{tpu_custom_call.1} parent=5 // pred_region
        %s437 = ssub.s32 %s26, 1
        // Predicated region
        $region53: #{tpu_custom_call.1} parent=51 // pred_check
          %p438 = pneg %p47
        $region54: #{tpu_custom_call.1} parent=51 // pred_check_branch
          %440 = sbr.rel (%p438) target = $region56
        $region55: #{tpu_custom_call.1} parent=51 // pred_region
          %441 = dma.done [#allocation3], 2048
        $region56: #{tpu_custom_call.1} parent=51 // pred_fallthru
          _
        // Predicated region
        $region57: #{tpu_custom_call.1} parent=51 // pred_check
          %p442 = pneg %p68
        $region58: #{tpu_custom_call.1} parent=51 // pred_check_branch
          %444 = sbr.rel (%p442) target = $region60
        $region59: #{tpu_custom_call.1} parent=51 // pred_region
          %445 = dma.done [#allocation6], 2048
        $region60: #{tpu_custom_call.1} parent=51 // pred_fallthru
          _
        %s446 = sand.u32 %s31, 1
        %s447 = scalar_lea.sflag [#allocation3], %s446
        %s448 = sand.u32 %s81, 1
        %s449 = smul.addr %s448, 64
        %s450 = scalar_lea.vmem [#allocation7], %s449
        // Predicated region
        $region61: #{tpu_custom_call.1} parent=51 // pred_check
          %p451 = pneg %p94
        $region62: #{tpu_custom_call.1} parent=51 // pred_check_branch
          %453 = sbr.rel (%p451) target = $region64
        $region63: #{tpu_custom_call.1} parent=51 // pred_region
          %454 = dma.done %s447, 1024
        $region64: #{tpu_custom_call.1} parent=51 // pred_fallthru
          _
        %p455 = pneg %p47
        %p456 = pneg %p44
        %p457 = pneg %p68
        %p458 = pneg %p65
        %s459 = sand.u32 %s31, 1
        %s460 = scalar_lea.sflag [#allocation3], %s459
        %s461 = sand.u32 %s81, 1
        %s462 = smul.addr %s461, 64
        %s463 = scalar_lea.vmem [#allocation7], %s462
        %p464 = pneg %p94
        %p465 = pneg %p91
        %p466 = scmp.lt.s32.totalorder %s31, 1
        %s467 = scalar_select %p466, %s31, 1
        %s468 = smul.addr %s467, 16
        %s469 = smul.addr %s468, 8
        %s470 = scalar_lea.vmem %s3, %s469
        %p471 = pneg %p120
        %p472 = pneg %p117
        %p473 = scmp.lt.s32.totalorder %s31, 1
        %s474 = scalar_select %p473, %s31, 1
        %s475 = smul.addr %s474, 16
        %s476 = smul.addr %s475, 8
        %s477 = scalar_lea.vmem %s4, %s476
        %p478 = pneg %p146
        %p479 = pneg %p143
        %p480 = scmp.lt.s32.totalorder %s31, 1
        %s481 = scalar_select %p480, %s31, 1
        %s482 = scalar_lea.vmem %s5, %s481
        %p483 = pneg %p172
        %p484 = pneg %p169
        %p485 = scmp.lt.s32.totalorder %s31, 1
        %s486 = scalar_select %p485, %s31, 1
        %s487 = smul.addr %s486, 2
        %s488 = smul.addr %s487, 8
        %s489 = scalar_lea.vmem %s6, %s488
        %p490 = pneg %p198
        %p491 = pneg %p195
        %p492 = scmp.lt.s32.totalorder %s31, 1
        %s493 = scalar_select %p492, %s31, 1
        %s494 = smul.addr %s493, 8
        %s495 = scalar_lea.vmem %s7, %s494
        %p496 = pneg %p224
        %p497 = pneg %p221
        %p498 = pneg %p250
        %p499 = pneg %p247
        %s500 = sand.u32 %s237, 1
        %s501 = scalar_lea.sflag [#allocation4], %s500
        %s502 = sand.u32 %s237, 1
        %s503 = smul.addr %s502, 128
        %s504 = scalar_lea.vmem [#allocation8], %s503
        %p505 = pneg %p276
        %p506 = pneg %p273
        %s507 = sand.u32 %s31, 1
        %s508 = scalar_lea.sflag [#allocation10], %s507
        %s509 = sand.u32 %s263, 1
        %s510 = smul.addr %s509, 128
        %s511 = scalar_lea.vmem [#allocation9], %s510
        %p512 = pneg %p302
        %p513 = pneg %p299
        %p514 = scmp.lt.s32.totalorder %s31, 1
        %s515 = scalar_select %p514, %s31, 1
        %s516 = smul.addr %s515, 16
        %s517 = smul.addr %s516, 8
        %s518 = scalar_lea.vmem %s10, %s517
        %p519 = pneg %p328
        %p520 = pneg %p325
        %s521 = sand.u32 %s31, 1
        %s522 = scalar_lea.sflag [#allocation10], %s521
        %s523 = sand.u32 %s315, 1
        %s524 = scalar_lea.vmem [#allocation11], %s523
        %p525 = scmp.lt.s32.totalorder %s31, 1
        %s526 = scalar_select %p525, %s31, 1
        %s527 = smul.addr %s526, 16
        %s528 = smul.addr %s527, 8
        %s529 = scalar_lea.vmem %s3, %s528
        %p530 = scmp.lt.s32.totalorder %s31, 1
        %s531 = scalar_select %p530, %s31, 1
        %s532 = smul.addr %s531, 16
        %s533 = smul.addr %s532, 8
        %s534 = scalar_lea.vmem %s4, %s533
        %p535 = scmp.lt.s32.totalorder %s31, 1
        %s536 = scalar_select %p535, %s31, 1
        %s537 = scalar_lea.vmem %s5, %s536
        %p538 = scmp.lt.s32.totalorder %s31, 1
        %s539 = scalar_select %p538, %s31, 1
        %s540 = smul.addr %s539, 2
        %s541 = smul.addr %s540, 8
        %s542 = scalar_lea.vmem %s6, %s541
        %p543 = scmp.lt.s32.totalorder %s31, 1
        %s544 = scalar_select %p543, %s31, 1
        %s545 = smul.addr %s544, 8
        %s546 = scalar_lea.vmem %s7, %s545
        %p547 = scmp.lt.s32.totalorder %s31, 1
        %s548 = scalar_select %p547, %s31, 1
        %s549 = smul.addr %s548, 16
        %s550 = smul.addr %s549, 8
        %s551 = scalar_lea.vmem %s10, %s550
        %v553 = vld [vmem:[#allocation2] sm:$0xf]
        %v554 = vld [vmem:[#allocation2 + $0x4] sm:$0xf]
        %v555 = vld [vmem:[#allocation2 + $0x8] sm:$0xf]
        %v556 = vld [vmem:[#allocation2 + $0xc] sm:$0xf]
        %v557 = vld [vmem:[#allocation2 + $0x10] sm:$0xf]
        %v558 = vld [vmem:[#allocation2 + $0x14] sm:$0xf]
        %v559 = vld [vmem:[#allocation2 + $0x18] sm:$0xf]
        %v560 = vld [vmem:[#allocation2 + $0x1c] sm:$0xf]
        %v561 = vld [vmem:[#allocation2 + $0x20] sm:$0xf]
        %v562 = vld [vmem:[#allocation2 + $0x24] sm:$0xf]
        %v563 = vld [vmem:[#allocation2 + $0x28] sm:$0xf]
        %v564 = vld [vmem:[#allocation2 + $0x2c] sm:$0xf]
        %v565 = vld [vmem:[#allocation2 + $0x30] sm:$0xf]
        %v566 = vld [vmem:[#allocation2 + $0x34] sm:$0xf]
        %v567 = vld [vmem:[#allocation2 + $0x38] sm:$0xf]
        %v568 = vld [vmem:[#allocation2 + $0x3c] sm:$0xf]
        %v569 = vld [vmem:[#allocation2 + $0x40] sm:$0xf]
        %v570 = vld [vmem:[#allocation2 + $0x44] sm:$0xf]
        %v571 = vld [vmem:[#allocation2 + $0x48] sm:$0xf]
        %v572 = vld [vmem:[#allocation2 + $0x4c] sm:$0xf]
        %v573 = vld [vmem:[#allocation2 + $0x50] sm:$0xf]
        %v574 = vld [vmem:[#allocation2 + $0x54] sm:$0xf]
        %v575 = vld [vmem:[#allocation2 + $0x58] sm:$0xf]
        %v576 = vld [vmem:[#allocation2 + $0x5c] sm:$0xf]
        %v577 = vld [vmem:[#allocation2 + $0x60] sm:$0xf]
        %v578 = vld [vmem:[#allocation2 + $0x64] sm:$0xf]
        %v579 = vld [vmem:[#allocation2 + $0x68] sm:$0xf]
        %v580 = vld [vmem:[#allocation2 + $0x6c] sm:$0xf]
        %v581 = vld [vmem:[#allocation2 + $0x70] sm:$0xf]
        %v582 = vld [vmem:[#allocation2 + $0x74] sm:$0xf]
        %v583 = vld [vmem:[#allocation2 + $0x78] sm:$0xf]
        %v584 = vld [vmem:[#allocation2 + $0x7c] sm:$0xf]
        %v585 = vld [vmem:[%s450] sm:$0xf]
        %v586 = vld [vmem:[%s450 + $0x4] sm:$0xf]
        %v587 = vld [vmem:[%s450 + $0x8] sm:$0xf]
        %v588 = vld [vmem:[%s450 + $0xc] sm:$0xf]
        %v589 = vld [vmem:[%s450 + $0x10] sm:$0xf]
        %v590 = vld [vmem:[%s450 + $0x14] sm:$0xf]
        %v591 = vld [vmem:[%s450 + $0x18] sm:$0xf]
        %v592 = vld [vmem:[%s450 + $0x1c] sm:$0xf]
        %v593 = vld [vmem:[%s450 + $0x20] sm:$0xf]
        %v594 = vld [vmem:[%s450 + $0x24] sm:$0xf]
        %v595 = vld [vmem:[%s450 + $0x28] sm:$0xf]
        %v596 = vld [vmem:[%s450 + $0x2c] sm:$0xf]
        %v597 = vld [vmem:[%s450 + $0x30] sm:$0xf]
        %v598 = vld [vmem:[%s450 + $0x34] sm:$0xf]
        %v599 = vld [vmem:[%s450 + $0x38] sm:$0xf]
        %v600 = vld [vmem:[%s450 + $0x3c] sm:$0xf]
        %v633 = vunpack.c.l.b16 %v553
        %v634 = vunpack.c.l.b16 %v554
        %v635 = vunpack.c.l.b16 %v555
        %v636 = vunpack.c.l.b16 %v556
        %v637 = vunpack.c.l.b16 %v557
        %v638 = vunpack.c.l.b16 %v558
        %v639 = vunpack.c.l.b16 %v559
        %v640 = vunpack.c.l.b16 %v560
        %v641 = vunpack.c.l.b16 %v561
        %v642 = vunpack.c.l.b16 %v562
        %v643 = vunpack.c.l.b16 %v563
        %v644 = vunpack.c.l.b16 %v564
        %v645 = vunpack.c.l.b16 %v565
        %v646 = vunpack.c.l.b16 %v566
        %v647 = vunpack.c.l.b16 %v567
        %v648 = vunpack.c.l.b16 %v568
        %v649 = vunpack.c.l.b16 %v569
        %v650 = vunpack.c.l.b16 %v570
        %v651 = vunpack.c.l.b16 %v571
        %v652 = vunpack.c.l.b16 %v572
        %v653 = vunpack.c.l.b16 %v573
        %v654 = vunpack.c.l.b16 %v574
        %v655 = vunpack.c.l.b16 %v575
        %v656 = vunpack.c.l.b16 %v576
        %v657 = vunpack.c.l.b16 %v577
        %v658 = vunpack.c.l.b16 %v578
        %v659 = vunpack.c.l.b16 %v579
        %v660 = vunpack.c.l.b16 %v580
        %v661 = vunpack.c.l.b16 %v581
        %v662 = vunpack.c.l.b16 %v582
        %v663 = vunpack.c.l.b16 %v583
        %v664 = vunpack.c.l.b16 %v584
        %v665 = vpack.c.b16 %v634, %v633
        %v666 = vpack.c.b16 %v636, %v635
        %v667 = vpack.c.b16 %v638, %v637
        %v668 = vpack.c.b16 %v640, %v639
        %v669 = vpack.c.b16 %v642, %v641
        %v670 = vpack.c.b16 %v644, %v643
        %v671 = vpack.c.b16 %v646, %v645
        %v672 = vpack.c.b16 %v648, %v647
        %v673 = vpack.c.b16 %v650, %v649
        %v674 = vpack.c.b16 %v652, %v651
        %v675 = vpack.c.b16 %v654, %v653
        %v676 = vpack.c.b16 %v656, %v655
        %v677 = vpack.c.b16 %v658, %v657
        %v678 = vpack.c.b16 %v660, %v659
        %v679 = vpack.c.b16 %v662, %v661
        %v680 = vpack.c.b16 %v664, %v663
        %v713 = vunpack.c.l.b16 %v585
        %v714 = vunpack.c.l.b16 %v586
        %v715 = vunpack.c.l.b16 %v587
        %v716 = vunpack.c.l.b16 %v588
        %v717 = vunpack.c.l.b16 %v589
        %v718 = vunpack.c.l.b16 %v590
        %v719 = vunpack.c.l.b16 %v591
        %v720 = vunpack.c.l.b16 %v592
        %v721 = vunpack.c.l.b16 %v593
        %v722 = vunpack.c.l.b16 %v594
        %v723 = vunpack.c.l.b16 %v595
        %v724 = vunpack.c.l.b16 %v596
        %v725 = vunpack.c.l.b16 %v597
        %v726 = vunpack.c.l.b16 %v598
        %v727 = vunpack.c.l.b16 %v599
        %v728 = vunpack.c.l.b16 %v600
        %v729 = vpack.c.b16 %v714, %v713
        %v730 = vpack.c.b16 %v716, %v715
        %v731 = vpack.c.b16 %v718, %v717
        %v732 = vpack.c.b16 %v720, %v719
        %v733 = vpack.c.b16 %v722, %v721
        %v734 = vpack.c.b16 %v724, %v723
        %v735 = vpack.c.b16 %v726, %v725
        %v736 = vpack.c.b16 %v728, %v727
        %745 = vmatprep.subr.bf16.mxu0 0
        %746 = vmatpush1.bf16.msra.mxu0 %v729
        %747 = vmatprep.subr.bf16.mxu0 0
        %748 = vmatpush1.bf16.msra.mxu0 %v730
        %749 = vmatprep.subr.bf16.mxu0 0
        %750 = vmatpush1.bf16.msra.mxu0 %v731
        %751 = vmatprep.subr.bf16.mxu0 0
        %752 = vmatpush1.bf16.msra.mxu0 %v732
        %753 = vmatprep.subr.bf16.mxu0 0
        %754 = vmatpush1.bf16.msra.mxu0 %v733
        %755 = vmatprep.subr.bf16.mxu0 0
        %756 = vmatpush1.bf16.msra.mxu0 %v734
        %757 = vmatprep.subr.bf16.mxu0 0
        %758 = vmatpush1.bf16.msra.mxu0 %v735
        %759 = vmatprep.subr.bf16.mxu0 0
        %760 = vmatpush1.bf16.msra.mxu0 %v736
        %761 = vmatprep.subr.bf16.mxu0 0
        %762 = vmatpush1.bf16.msra.mxu0 0
        %763 = vmatprep.subr.bf16.mxu0 0
        %764 = vmatpush1.bf16.msra.mxu0 0
        %765 = vmatprep.subr.bf16.mxu0 0
        %766 = vmatpush1.bf16.msra.mxu0 0
        %767 = vmatprep.subr.bf16.mxu0 0
        %768 = vmatpush1.bf16.msra.mxu0 0
        %769 = vmatprep.subr.bf16.mxu0 0
        %770 = vmatpush1.bf16.msra.mxu0 0
        %771 = vmatprep.subr.bf16.mxu0 0
        %772 = vmatpush1.bf16.msra.mxu0 0
        %773 = vmatprep.subr.bf16.mxu0 0
        %774 = vmatpush1.bf16.msra.mxu0 0
        %775 = vmatprep.subr.bf16.mxu0 0
        %776 = vmatpush1.bf16.msra.mxu0 0
        %777 = vmatprep.mubr.bf16.mxu0 0
        %778 = vmatmul.mubr.bf16.gmra.mrb[0].mxu0 %v665
        %v779 = vpop.f32.mrb[0].mxu0
        %v780 = vadd.f32 0.0, %v779
        %v781 = vpop.f32.mrb[0].mxu0
        %v782 = vpop.f32.mrb[0].mxu0
        %v783 = vadd.f32 0.0, %v782
        %v784 = vpop.f32.mrb[0].mxu0
        %785 = vmatprep.mubr.bf16.mxu0 0
        %786 = vmatmul.mubr.bf16.gmra.mrb[0].mxu0 %v666
        %v787 = vpop.f32.mrb[0].mxu0
        %v788 = vadd.f32 0.0, %v787
        %v789 = vpop.f32.mrb[0].mxu0
        %v790 = vpop.f32.mrb[0].mxu0
        %v791 = vadd.f32 0.0, %v790
        %v792 = vpop.f32.mrb[0].mxu0
        %793 = vmatprep.mubr.bf16.mxu0 0
        %794 = vmatmul.mubr.bf16.gmra.mrb[0].mxu0 %v667
        %v795 = vpop.f32.mrb[0].mxu0
        %v796 = vadd.f32 0.0, %v795
        %v797 = vpop.f32.mrb[0].mxu0
        %v798 = vpop.f32.mrb[0].mxu0
        %v799 = vadd.f32 0.0, %v798
        %v800 = vpop.f32.mrb[0].mxu0
        %801 = vmatprep.mubr.bf16.mxu0 0
        %802 = vmatmul.mubr.bf16.gmra.mrb[0].mxu0 %v668
        %v803 = vpop.f32.mrb[0].mxu0
        %v804 = vadd.f32 0.0, %v803
        %v805 = vpop.f32.mrb[0].mxu0
        %v806 = vpop.f32.mrb[0].mxu0
        %v807 = vadd.f32 0.0, %v806
        %v808 = vpop.f32.mrb[0].mxu0
        %809 = vmatprep.mubr.bf16.mxu0 0
        %810 = vmatmul.mubr.bf16.gmra.mrb[0].mxu0 %v669
        %v811 = vpop.f32.mrb[0].mxu0
        %v812 = vadd.f32 0.0, %v811
        %v813 = vpop.f32.mrb[0].mxu0
        %v814 = vpop.f32.mrb[0].mxu0
        %v815 = vadd.f32 0.0, %v814
        %v816 = vpop.f32.mrb[0].mxu0
        %817 = vmatprep.mubr.bf16.mxu0 0
        %818 = vmatmul.mubr.bf16.gmra.mrb[0].mxu0 %v670
        %v819 = vpop.f32.mrb[0].mxu0
        %v820 = vadd.f32 0.0, %v819
        %v821 = vpop.f32.mrb[0].mxu0
        %v822 = vpop.f32.mrb[0].mxu0
        %v823 = vadd.f32 0.0, %v822
        %v824 = vpop.f32.mrb[0].mxu0
        %825 = vmatprep.mubr.bf16.mxu0 0
        %826 = vmatmul.mubr.bf16.gmra.mrb[0].mxu0 %v671
        %v827 = vpop.f32.mrb[0].mxu0
        %v828 = vadd.f32 0.0, %v827
        %v829 = vpop.f32.mrb[0].mxu0
        %v830 = vpop.f32.mrb[0].mxu0
        %v831 = vadd.f32 0.0, %v830
        %v832 = vpop.f32.mrb[0].mxu0
        %833 = vmatprep.mubr.bf16.mxu0 0
        %834 = vmatmul.mubr.bf16.gmra.mrb[0].mxu0 %v672
        %v835 = vpop.f32.mrb[0].mxu0
        %v836 = vadd.f32 0.0, %v835
        %v837 = vpop.f32.mrb[0].mxu0
        %v838 = vpop.f32.mrb[0].mxu0
        %v839 = vadd.f32 0.0, %v838
        %v840 = vpop.f32.mrb[0].mxu0
        %841 = vmatprep.mubr.bf16.mxu0 0
        %842 = vmatmul.mubr.bf16.gmra.mrb[0].mxu0 %v673
        %v843 = vpop.f32.mrb[0].mxu0
        %v844 = vadd.f32 0.0, %v843
        %v845 = vpop.f32.mrb[0].mxu0
        %v846 = vpop.f32.mrb[0].mxu0
        %v847 = vadd.f32 0.0, %v846
        %v848 = vpop.f32.mrb[0].mxu0
        %849 = vmatprep.mubr.bf16.mxu0 0
        %850 = vmatmul.mubr.bf16.gmra.mrb[0].mxu0 %v674
        %v851 = vpop.f32.mrb[0].mxu0
        %v852 = vadd.f32 0.0, %v851
        %v853 = vpop.f32.mrb[0].mxu0
        %v854 = vpop.f32.mrb[0].mxu0
        %v855 = vadd.f32 0.0, %v854
        %v856 = vpop.f32.mrb[0].mxu0
        %857 = vmatprep.mubr.bf16.mxu0 0
        %858 = vmatmul.mubr.bf16.gmra.mrb[0].mxu0 %v675
        %v859 = vpop.f32.mrb[0].mxu0
        %v860 = vadd.f32 0.0, %v859
        %v861 = vpop.f32.mrb[0].mxu0
        %v862 = vpop.f32.mrb[0].mxu0
        %v863 = vadd.f32 0.0, %v862
        %v864 = vpop.f32.mrb[0].mxu0
        %865 = vmatprep.mubr.bf16.mxu0 0
        %866 = vmatmul.mubr.bf16.gmra.mrb[0].mxu0 %v676
        %v867 = vpop.f32.mrb[0].mxu0
        %v868 = vadd.f32 0.0, %v867
        %v869 = vpop.f32.mrb[0].mxu0
        %v870 = vpop.f32.mrb[0].mxu0
        %v871 = vadd.f32 0.0, %v870
        %v872 = vpop.f32.mrb[0].mxu0
        %873 = vmatprep.mubr.bf16.mxu0 0
        %874 = vmatmul.mubr.bf16.gmra.mrb[0].mxu0 %v677
        %v875 = vpop.f32.mrb[0].mxu0
        %v876 = vadd.f32 0.0, %v875
        %v877 = vpop.f32.mrb[0].mxu0
        %v878 = vpop.f32.mrb[0].mxu0
        %v879 = vadd.f32 0.0, %v878
        %v880 = vpop.f32.mrb[0].mxu0
        %881 = vmatprep.mubr.bf16.mxu0 0
        %882 = vmatmul.mubr.bf16.gmra.mrb[0].mxu0 %v678
        %v883 = vpop.f32.mrb[0].mxu0
        %v884 = vadd.f32 0.0, %v883
        %v885 = vpop.f32.mrb[0].mxu0
        %v886 = vpop.f32.mrb[0].mxu0
        %v887 = vadd.f32 0.0, %v886
        %v888 = vpop.f32.mrb[0].mxu0
        %889 = vmatprep.mubr.bf16.mxu0 0
        %890 = vmatmul.mubr.bf16.gmra.mrb[0].mxu0 %v679
        %v891 = vpop.f32.mrb[0].mxu0
        %v892 = vadd.f32 0.0, %v891
        %v893 = vpop.f32.mrb[0].mxu0
        %v894 = vpop.f32.mrb[0].mxu0
        %v895 = vadd.f32 0.0, %v894
        %v896 = vpop.f32.mrb[0].mxu0
        %897 = vmatprep.mubr.bf16.mxu0 0
        %898 = vmatmul.mubr.bf16.gmra.mrb[0].mxu0 %v680
        %v899 = vpop.f32.mrb[0].mxu0
        %v900 = vadd.f32 0.0, %v899
        %v901 = vpop.f32.mrb[0].mxu0
        %v902 = vpop.f32.mrb[0].mxu0
        %v903 = vadd.f32 0.0, %v902
        %v904 = vpop.f32.mrb[0].mxu0
        %905 = vdwg.mxu0
        %v906 = vmax.f32 %v780, 0.0
        %v907 = vmax.f32 %v783, 0.0
        %v908 = vmax.f32 %v788, 0.0
        %v909 = vmax.f32 %v791, 0.0
        %v910 = vmax.f32 %v796, 0.0
        %v911 = vmax.f32 %v799, 0.0
        %v912 = vmax.f32 %v804, 0.0
        %v913 = vmax.f32 %v807, 0.0
        %v914 = vmax.f32 %v812, 0.0
        %v915 = vmax.f32 %v815, 0.0
        %v916 = vmax.f32 %v820, 0.0
        %v917 = vmax.f32 %v823, 0.0
        %v918 = vmax.f32 %v828, 0.0
        %v919 = vmax.f32 %v831, 0.0
        %v920 = vmax.f32 %v836, 0.0
        %v921 = vmax.f32 %v839, 0.0
        %v922 = vmax.f32 %v844, 0.0
        %v923 = vmax.f32 %v847, 0.0
        %v924 = vmax.f32 %v852, 0.0
        %v925 = vmax.f32 %v855, 0.0
        %v926 = vmax.f32 %v860, 0.0
        %v927 = vmax.f32 %v863, 0.0
        %v928 = vmax.f32 %v868, 0.0
        %v929 = vmax.f32 %v871, 0.0
        %v930 = vmax.f32 %v876, 0.0
        %v931 = vmax.f32 %v879, 0.0
        %v932 = vmax.f32 %v884, 0.0
        %v933 = vmax.f32 %v887, 0.0
        %v934 = vmax.f32 %v892, 0.0
        %v935 = vmax.f32 %v895, 0.0
        %v936 = vmax.f32 %v900, 0.0
        %v937 = vmax.f32 %v903, 0.0
        %v938 = vld [vmem:[%s542] sm:$0xff]
        %v939 = vld [vmem:[%s542 + $0x8] sm:$0xff]
        %940 = vmatprep.subr.mxu0 0.0
        %941 = vmatpush1.msra.mxu0 %v906
        %942 = vmatprep.subr.mxu0 0.0
        %943 = vmatpush1.msra.mxu0 %v907
        %944 = vmatprep.subr.mxu0 0.0
        %945 = vmatpush1.msra.mxu0 %v908
        %946 = vmatprep.subr.mxu0 0.0
        %947 = vmatpush1.msra.mxu0 %v909
        %948 = vmatprep.subr.mxu0 0.0
        %949 = vmatpush1.msra.mxu0 %v910
        %950 = vmatprep.subr.mxu0 0.0
        %951 = vmatpush1.msra.mxu0 %v911
        %952 = vmatprep.subr.mxu0 0.0
        %953 = vmatpush1.msra.mxu0 %v912
        %954 = vmatprep.subr.mxu0 0.0
        %955 = vmatpush1.msra.mxu0 %v913
        %956 = vmatprep.subr.mxu0 0.0
        %957 = vmatpush1.msra.mxu0 %v914
        %958 = vmatprep.subr.mxu0 0.0
        %959 = vmatpush1.msra.mxu0 %v915
        %960 = vmatprep.subr.mxu0 0.0
        %961 = vmatpush1.msra.mxu0 %v916
        %962 = vmatprep.subr.mxu0 0.0
        %963 = vmatpush1.msra.mxu0 %v917
        %964 = vmatprep.subr.mxu0 0.0
        %965 = vmatpush1.msra.mxu0 %v918
        %966 = vmatprep.subr.mxu0 0.0
        %967 = vmatpush1.msra.mxu0 %v919
        %968 = vmatprep.subr.mxu0 0.0
        %969 = vmatpush1.msra.mxu0 %v920
        %970 = vmatprep.subr.mxu0 0.0
        %971 = vmatpush1.msra.mxu0 %v921
        %972 = vmatprep.subr.mxu0 0.0
        %973 = vmatpush1.msra.mxu0 %v922
        %974 = vmatprep.subr.mxu0 0.0
        %975 = vmatpush1.msra.mxu0 %v923
        %976 = vmatprep.subr.mxu0 0.0
        %977 = vmatpush1.msra.mxu0 %v924
        %978 = vmatprep.subr.mxu0 0.0
        %979 = vmatpush1.msra.mxu0 %v925
        %980 = vmatprep.subr.mxu0 0.0
        %981 = vmatpush1.msra.mxu0 %v926
        %982 = vmatprep.subr.mxu0 0.0
        %983 = vmatpush1.msra.mxu0 %v927
        %984 = vmatprep.subr.mxu0 0.0
        %985 = vmatpush1.msra.mxu0 %v928
        %986 = vmatprep.subr.mxu0 0.0
        %987 = vmatpush1.msra.mxu0 %v929
        %988 = vmatprep.subr.mxu0 0.0
        %989 = vmatpush1.msra.mxu0 %v930
        %990 = vmatprep.subr.mxu0 0.0
        %991 = vmatpush1.msra.mxu0 %v931
        %992 = vmatprep.subr.mxu0 0.0
        %993 = vmatpush1.msra.mxu0 %v932
        %994 = vmatprep.subr.mxu0 0.0
        %995 = vmatpush1.msra.mxu0 %v933
        %996 = vmatprep.subr.mxu0 0.0
        %997 = vmatpush1.msra.mxu0 %v934
        %998 = vmatprep.subr.mxu0 0.0
        %999 = vmatpush1.msra.mxu0 %v935
        %1000 = vmatprep.subr.mxu0 0.0
        %1001 = vmatpush1.msra.mxu0 %v936
        %1002 = vmatprep.subr.mxu0 0.0
        %1003 = vmatpush1.msra.mxu0 %v937
        %1004 = vmatprep.mubr.f32.mxu0 %v939
        %1005 = vmatmul.mubr.f32.gmra.mrb[0].mxu0 %v938
        %v1006 = vpop.f32.mrb[0].mxu0
        %v1007 = vadd.f32 0.0, %v1006
        %v1008 = vpop.f32.mrb[0].mxu0
        %1009 = vdwg.mxu0
        %v1010 = vld [vmem:[%s529] sm:$0xff]
        %v1011 = vld [vmem:[%s529 + $0x8] sm:$0xff]
        %v1012 = vld [vmem:[%s529 + $0x10] sm:$0xff]
        %v1013 = vld [vmem:[%s529 + $0x18] sm:$0xff]
        %v1014 = vld [vmem:[%s529 + $0x20] sm:$0xff]
        %v1015 = vld [vmem:[%s529 + $0x28] sm:$0xff]
        %v1016 = vld [vmem:[%s529 + $0x30] sm:$0xff]
        %v1017 = vld [vmem:[%s529 + $0x38] sm:$0xff]
        %v1018 = vld [vmem:[%s529 + $0x40] sm:$0xff]
        %v1019 = vld [vmem:[%s529 + $0x48] sm:$0xff]
        %v1020 = vld [vmem:[%s529 + $0x50] sm:$0xff]
        %v1021 = vld [vmem:[%s529 + $0x58] sm:$0xff]
        %v1022 = vld [vmem:[%s529 + $0x60] sm:$0xff]
        %v1023 = vld [vmem:[%s529 + $0x68] sm:$0xff]
        %v1024 = vld [vmem:[%s529 + $0x70] sm:$0xff]
        %v1025 = vld [vmem:[%s529 + $0x78] sm:$0xff]
        %1026 = vmatprep.subr.mxu0 0.0
        %1027 = vmatpush1.msra.mxu0 %v1010
        %1028 = vmatprep.subr.mxu0 0.0
        %1029 = vmatpush1.msra.mxu0 %v1011
        %1030 = vmatprep.subr.mxu0 0.0
        %1031 = vmatpush1.msra.mxu0 %v1012
        %1032 = vmatprep.subr.mxu0 0.0
        %1033 = vmatpush1.msra.mxu0 %v1013
        %1034 = vmatprep.subr.mxu0 0.0
        %1035 = vmatpush1.msra.mxu0 %v1014
        %1036 = vmatprep.subr.mxu0 0.0
        %1037 = vmatpush1.msra.mxu0 %v1015
        %1038 = vmatprep.subr.mxu0 0.0
        %1039 = vmatpush1.msra.mxu0 %v1016
        %1040 = vmatprep.subr.mxu0 0.0
        %1041 = vmatpush1.msra.mxu0 %v1017
        %1042 = vmatprep.subr.mxu0 0.0
        %1043 = vmatpush1.msra.mxu0 %v1018
        %1044 = vmatprep.subr.mxu0 0.0
        %1045 = vmatpush1.msra.mxu0 %v1019
        %1046 = vmatprep.subr.mxu0 0.0
        %1047 = vmatpush1.msra.mxu0 %v1020
        %1048 = vmatprep.subr.mxu0 0.0
        %1049 = vmatpush1.msra.mxu0 %v1021
        %1050 = vmatprep.subr.mxu0 0.0
        %1051 = vmatpush1.msra.mxu0 %v1022
        %1052 = vmatprep.subr.mxu0 0.0
        %1053 = vmatpush1.msra.mxu0 %v1023
        %1054 = vmatprep.subr.mxu0 0.0
        %1055 = vmatpush1.msra.mxu0 %v1024
        %1056 = vmatprep.subr.mxu0 0.0
        %1057 = vmatpush1.msra.mxu0 %v1025
        %1058 = vmatprep.subr.mxu0 0.0
        %1059 = vmatpush1.msra.mxu0 0.0
        %1060 = vmatprep.subr.mxu0 0.0
        %1061 = vmatpush1.msra.mxu0 0.0
        %1062 = vmatprep.subr.mxu0 0.0
        %1063 = vmatpush1.msra.mxu0 0.0
        %1064 = vmatprep.subr.mxu0 0.0
        %1065 = vmatpush1.msra.mxu0 0.0
        %1066 = vmatprep.subr.mxu0 0.0
        %1067 = vmatpush1.msra.mxu0 0.0
        %1068 = vmatprep.subr.mxu0 0.0
        %1069 = vmatpush1.msra.mxu0 0.0
        %1070 = vmatprep.subr.mxu0 0.0
        %1071 = vmatpush1.msra.mxu0 0.0
        %1072 = vmatprep.subr.mxu0 0.0
        %1073 = vmatpush1.msra.mxu0 0.0
        %1074 = vmatprep.subr.mxu0 0.0
        %1075 = vmatpush1.msra.mxu0 0.0
        %1076 = vmatprep.subr.mxu0 0.0
        %1077 = vmatpush1.msra.mxu0 0.0
        %1078 = vmatprep.subr.mxu0 0.0
        %1079 = vmatpush1.msra.mxu0 0.0
        %1080 = vmatprep.subr.mxu0 0.0
        %1081 = vmatpush1.msra.mxu0 0.0
        %1082 = vmatprep.subr.mxu0 0.0
        %1083 = vmatpush1.msra.mxu0 0.0
        %1084 = vmatprep.subr.mxu0 0.0
        %1085 = vmatpush1.msra.mxu0 0.0
        %1086 = vmatprep.subr.mxu0 0.0
        %1087 = vmatpush1.msra.mxu0 0.0
        %1088 = vmatprep.subr.mxu0 0.0
        %1089 = vmatpush1.msra.mxu0 0.0
        %1090 = vmatprep.mubr.f32.mxu0 0.0
        %1091 = vmatmul.mubr.f32.gmra.mrb[0].mxu0 %v1007
        %v1092 = vpop.f32.mrb[0].mxu0
        %v1093 = vadd.f32 0.0, %v1092
        %v1094 = vpop.f32.mrb[0].mxu0
        %1095 = vdwg.mxu0
        %v1096 = vld [vmem:[%s546] sm:$0xff]
        %v1097 = vld [vmem:[#allocation5] sm:$0xff]
        %v1098 = vld [vmem:[#allocation5 + $0x8] sm:$0xff]
        %v1099 = vld [vmem:[#allocation5 + $0x10] sm:$0xff]
        %v1100 = vld [vmem:[#allocation5 + $0x18] sm:$0xff]
        %v1101 = vld [vmem:[#allocation5 + $0x20] sm:$0xff]
        %v1102 = vld [vmem:[#allocation5 + $0x28] sm:$0xff]
        %v1103 = vld [vmem:[#allocation5 + $0x30] sm:$0xff]
        %v1104 = vld [vmem:[#allocation5 + $0x38] sm:$0xff]
        %v1105 = vld [vmem:[#allocation5 + $0x40] sm:$0xff]
        %v1106 = vld [vmem:[#allocation5 + $0x48] sm:$0xff]
        %v1107 = vld [vmem:[#allocation5 + $0x50] sm:$0xff]
        %v1108 = vld [vmem:[#allocation5 + $0x58] sm:$0xff]
        %v1109 = vld [vmem:[#allocation5 + $0x60] sm:$0xff]
        %v1110 = vld [vmem:[#allocation5 + $0x68] sm:$0xff]
        %v1111 = vld [vmem:[#allocation5 + $0x70] sm:$0xff]
        %v1112 = vld [vmem:[#allocation5 + $0x78] sm:$0xff]
        %v1113 = vld [vmem:[%s534] sm:$0xff]
        %v1114 = vld [vmem:[%s534 + $0x8] sm:$0xff]
        %v1115 = vld [vmem:[%s534 + $0x10] sm:$0xff]
        %v1116 = vld [vmem:[%s534 + $0x18] sm:$0xff]
        %v1117 = vld [vmem:[%s534 + $0x20] sm:$0xff]
        %v1118 = vld [vmem:[%s534 + $0x28] sm:$0xff]
        %v1119 = vld [vmem:[%s534 + $0x30] sm:$0xff]
        %v1120 = vld [vmem:[%s534 + $0x38] sm:$0xff]
        %v1121 = vld [vmem:[%s534 + $0x40] sm:$0xff]
        %v1122 = vld [vmem:[%s534 + $0x48] sm:$0xff]
        %v1123 = vld [vmem:[%s534 + $0x50] sm:$0xff]
        %v1124 = vld [vmem:[%s534 + $0x58] sm:$0xff]
        %v1125 = vld [vmem:[%s534 + $0x60] sm:$0xff]
        %v1126 = vld [vmem:[%s534 + $0x68] sm:$0xff]
        %v1127 = vld [vmem:[%s534 + $0x70] sm:$0xff]
        %v1128 = vld [vmem:[%s534 + $0x78] sm:$0xff]
        %v1129 = vld [vmem:[%s537] sm:$0x1]
        %v1131 = vlaneseq
        %v1132 = vshrl.u32 %v1131, 7
        %v1133 = vsub.s32 0, %v1132
        %v1134 = vrot.slane %v1129, %v1133
        %1136 = vmatprep.subr.mxu0 0.0
        %1137 = vmatpush1.msra.mxu0 %v1113
        %1138 = vmatprep.subr.mxu0 0.0
        %1139 = vmatpush1.msra.mxu0 %v1114
        %1140 = vmatprep.subr.mxu0 0.0
        %1141 = vmatpush1.msra.mxu0 %v1115
        %1142 = vmatprep.subr.mxu0 0.0
        %1143 = vmatpush1.msra.mxu0 %v1116
        %1144 = vmatprep.subr.mxu0 0.0
        %1145 = vmatpush1.msra.mxu0 %v1117
        %1146 = vmatprep.subr.mxu0 0.0
        %1147 = vmatpush1.msra.mxu0 %v1118
        %1148 = vmatprep.subr.mxu0 0.0
        %1149 = vmatpush1.msra.mxu0 %v1119
        %1150 = vmatprep.subr.mxu0 0.0
        %1151 = vmatpush1.msra.mxu0 %v1120
        %1152 = vmatprep.subr.mxu0 0.0
        %1153 = vmatpush1.msra.mxu0 %v1121
        %1154 = vmatprep.subr.mxu0 0.0
        %1155 = vmatpush1.msra.mxu0 %v1122
        %1156 = vmatprep.subr.mxu0 0.0
        %1157 = vmatpush1.msra.mxu0 %v1123
        %1158 = vmatprep.subr.mxu0 0.0
        %1159 = vmatpush1.msra.mxu0 %v1124
        %1160 = vmatprep.subr.mxu0 0.0
        %1161 = vmatpush1.msra.mxu0 %v1125
        %1162 = vmatprep.subr.mxu0 0.0
        %1163 = vmatpush1.msra.mxu0 %v1126
        %1164 = vmatprep.subr.mxu0 0.0
        %1165 = vmatpush1.msra.mxu0 %v1127
        %1166 = vmatprep.subr.mxu0 0.0
        %1167 = vmatpush1.msra.mxu0 %v1128
        %1168 = vmatprep.subr.mxu0 0.0
        %1169 = vmatpush1.msra.mxu0 0.0
        %1170 = vmatprep.subr.mxu0 0.0
        %1171 = vmatpush1.msra.mxu0 0.0
        %1172 = vmatprep.subr.mxu0 0.0
        %1173 = vmatpush1.msra.mxu0 0.0
        %1174 = vmatprep.subr.mxu0 0.0
        %1175 = vmatpush1.msra.mxu0 0.0
        %1176 = vmatprep.subr.mxu0 0.0
        %1177 = vmatpush1.msra.mxu0 0.0
        %1178 = vmatprep.subr.mxu0 0.0
        %1179 = vmatpush1.msra.mxu0 0.0
        %1180 = vmatprep.subr.mxu0 0.0
        %1181 = vmatpush1.msra.mxu0 0.0
        %1182 = vmatprep.subr.mxu0 0.0
        %1183 = vmatpush1.msra.mxu0 0.0
        %1184 = vmatprep.subr.mxu0 0.0
        %1185 = vmatpush1.msra.mxu0 0.0
        %1186 = vmatprep.subr.mxu0 0.0
        %1187 = vmatpush1.msra.mxu0 0.0
        %1188 = vmatprep.subr.mxu0 0.0
        %1189 = vmatpush1.msra.mxu0 0.0
        %1190 = vmatprep.subr.mxu0 0.0
        %1191 = vmatpush1.msra.mxu0 0.0
        %1192 = vmatprep.subr.mxu0 0.0
        %1193 = vmatpush1.msra.mxu0 0.0
        %1194 = vmatprep.subr.mxu0 0.0
        %1195 = vmatpush1.msra.mxu0 0.0
        %1196 = vmatprep.subr.mxu0 0.0
        %1197 = vmatpush1.msra.mxu0 0.0
        %1198 = vmatprep.subr.mxu0 0.0
        %1199 = vmatpush1.msra.mxu0 0.0
        %1200 = vmatprep.mubr.f32.mxu0 0.0
        %1201 = vmatmul.mubr.f32.gmra.mrb[0].mxu0 %v1093
        %v1202 = vpop.f32.mrb[0].mxu0
        %v1203 = vadd.f32 %v1134, %v1202
        %v1204 = vpop.f32.mrb[0].mxu0
        %1205 = vdwg.mxu0
        %vm1206 = vcmask 31744
        %v1207 = vsel %vm1206, %v1203, -inf
        %1208 = vmax.xlane.f32.xlu0 %v1207
        %v1209 = vpop.xlane.xlu0 %1208
        %v1210 = vsub.f32 %v1203, %v1209
        %v1211 = vmul.f32 %v1210, 1.442695
        %v1212 = vpow.pop %v1211
        %v1213 = vsel %vm1206, %v1212, 0.0
        %1214 = vadd.xlane.f32.xlu0 %v1213
        %v1215 = vpop.xlane.xlu0 %1214
        %v1216 = vrcp.pop %v1215
        %v1217 = vmul.f32 %v1212, %v1216
        %v1218 = vsub.f32 %v1217, %v1096
        %v1219 = vmul.f32 %v1218, 0.125
        %1220 = vxpose.xlu0.b32.start [1/16] %v1093, 128
        %1221 = vxpose.xlu0.b32.cont [2/16] 0.0, 128
        %1222 = vxpose.xlu0.b32.cont [3/16] 0.0, 128
        %1223 = vxpose.xlu0.b32.cont [4/16] 0.0, 128
        %1224 = vxpose.xlu0.b32.cont [5/16] 0.0, 128
        %1225 = vxpose.xlu0.b32.cont [6/16] 0.0, 128
        %1226 = vxpose.xlu0.b32.cont [7/16] 0.0, 128
        %1227 = vxpose.xlu0.b32.cont [8/16] 0.0, 128
        %1228 = vxpose.xlu0.b32.cont [9/16] 0.0, 128
        %1229 = vxpose.xlu0.b32.cont [10/16] 0.0, 128
        %1230 = vxpose.xlu0.b32.cont [11/16] 0.0, 128
        %1231 = vxpose.xlu0.b32.cont [12/16] 0.0, 128
        %1232 = vxpose.xlu0.b32.cont [13/16] 0.0, 128
        %1233 = vxpose.xlu0.b32.cont [14/16] 0.0, 128
        %1234 = vxpose.xlu0.b32.cont [15/16] 0.0, 128
        %1235 = vxpose.xlu0.b32.end [16/16] 0.0, 128
        %v1236 = vpop.trf.xlu0
        %v1237 = vpop.trf.xlu0
        %v1238 = vpop.trf.xlu0
        %v1239 = vpop.trf.xlu0
        %v1240 = vpop.trf.xlu0
        %v1241 = vpop.trf.xlu0
        %v1242 = vpop.trf.xlu0
        %v1243 = vpop.trf.xlu0
        %v1244 = vpop.trf.xlu0
        %v1245 = vpop.trf.xlu0
        %v1246 = vpop.trf.xlu0
        %v1247 = vpop.trf.xlu0
        %v1248 = vpop.trf.xlu0
        %v1249 = vpop.trf.xlu0
        %v1250 = vpop.trf.xlu0
        %v1251 = vpop.trf.xlu0
        %vm1252 = vcmask 64512
        %v1254 = vsel %vm1252, %v1236, 0
        %v1257 = vsel %vm1252, %v1237, 0
        %v1260 = vsel %vm1252, %v1238, 0
        %v1263 = vsel %vm1252, %v1239, 0
        %v1266 = vsel %vm1252, %v1240, 0
        %v1269 = vsel %vm1252, %v1241, 0
        %v1272 = vsel %vm1252, %v1242, 0
        %v1275 = vsel %vm1252, %v1243, 0
        %v1278 = vsel %vm1252, %v1244, 0
        %v1281 = vsel %vm1252, %v1245, 0
        %v1284 = vsel %vm1252, %v1246, 0
        %v1287 = vsel %vm1252, %v1247, 0
        %v1290 = vsel %vm1252, %v1248, 0
        %v1293 = vsel %vm1252, %v1249, 0
        %v1296 = vsel %vm1252, %v1250, 0
        %v1299 = vsel %vm1252, %v1251, 0
        %1301 = vmatprep.subr.mxu0 0.0
        %1302 = vmatpush1.msra.mxu0 %v1219
        %1303 = vmatprep.subr.mxu0 0.0
        %1304 = vmatpush1.msra.mxu0 0.0
        %1305 = vmatprep.subr.mxu0 0.0
        %1306 = vmatpush1.msra.mxu0 0.0
        %1307 = vmatprep.subr.mxu0 0.0
        %1308 = vmatpush1.msra.mxu0 0.0
        %1309 = vmatprep.subr.mxu0 0.0
        %1310 = vmatpush1.msra.mxu0 0.0
        %1311 = vmatprep.subr.mxu0 0.0
        %1312 = vmatpush1.msra.mxu0 0.0
        %1313 = vmatprep.subr.mxu0 0.0
        %1314 = vmatpush1.msra.mxu0 0.0
        %1315 = vmatprep.subr.mxu0 0.0
        %1316 = vmatpush1.msra.mxu0 0.0
        %1317 = vmatprep.subr.mxu0 0.0
        %1318 = vmatpush1.msra.mxu0 0.0
        %1319 = vmatprep.subr.mxu0 0.0
        %1320 = vmatpush1.msra.mxu0 0.0
        %1321 = vmatprep.subr.mxu0 0.0
        %1322 = vmatpush1.msra.mxu0 0.0
        %1323 = vmatprep.subr.mxu0 0.0
        %1324 = vmatpush1.msra.mxu0 0.0
        %1325 = vmatprep.subr.mxu0 0.0
        %1326 = vmatpush1.msra.mxu0 0.0
        %1327 = vmatprep.subr.mxu0 0.0
        %1328 = vmatpush1.msra.mxu0 0.0
        %1329 = vmatprep.subr.mxu0 0.0
        %1330 = vmatpush1.msra.mxu0 0.0
        %1331 = vmatprep.subr.mxu0 0.0
        %1332 = vmatpush1.msra.mxu0 0.0
        %1333 = vmatprep.subr.mxu0 0.0
        %1334 = vmatpush1.msra.mxu0 0.0
        %1335 = vmatprep.subr.mxu0 0.0
        %1336 = vmatpush1.msra.mxu0 0.0
        %1337 = vmatprep.subr.mxu0 0.0
        %1338 = vmatpush1.msra.mxu0 0.0
        %1339 = vmatprep.subr.mxu0 0.0
        %1340 = vmatpush1.msra.mxu0 0.0
        %1341 = vmatprep.subr.mxu0 0.0
        %1342 = vmatpush1.msra.mxu0 0.0
        %1343 = vmatprep.subr.mxu0 0.0
        %1344 = vmatpush1.msra.mxu0 0.0
        %1345 = vmatprep.subr.mxu0 0.0
        %1346 = vmatpush1.msra.mxu0 0.0
        %1347 = vmatprep.subr.mxu0 0.0
        %1348 = vmatpush1.msra.mxu0 0.0
        %1349 = vmatprep.subr.mxu0 0.0
        %1350 = vmatpush1.msra.mxu0 0.0
        %1351 = vmatprep.subr.mxu0 0.0
        %1352 = vmatpush1.msra.mxu0 0.0
        %1353 = vmatprep.subr.mxu0 0.0
        %1354 = vmatpush1.msra.mxu0 0.0
        %1355 = vmatprep.subr.mxu0 0.0
        %1356 = vmatpush1.msra.mxu0 0.0
        %1357 = vmatprep.subr.mxu0 0.0
        %1358 = vmatpush1.msra.mxu0 0.0
        %1359 = vmatprep.subr.mxu0 0.0
        %1360 = vmatpush1.msra.mxu0 0.0
        %1361 = vmatprep.subr.mxu0 0.0
        %1362 = vmatpush1.msra.mxu0 0.0
        %1363 = vmatprep.subr.mxu0 0.0
        %1364 = vmatpush1.msra.mxu0 0.0
        %1365 = vmatprep.mubr.f32.mxu0 0.0
        %1366 = vmatmul.mubr.f32.gmra.mrb[0].mxu0 %v1254
        %v1367 = vpop.f32.mrb[0].mxu0
        %v1368 = vadd.f32 0.0, %v1367
        %v1369 = vpop.f32.mrb[0].mxu0
        %1370 = vmatprep.mubr.f32.mxu0 0.0
        %1371 = vmatmul.mubr.f32.gmra.mrb[0].mxu0 %v1257
        %v1372 = vpop.f32.mrb[0].mxu0
        %v1373 = vadd.f32 0.0, %v1372
        %v1374 = vpop.f32.mrb[0].mxu0
        %1375 = vmatprep.mubr.f32.mxu0 0.0
        %1376 = vmatmul.mubr.f32.gmra.mrb[0].mxu0 %v1260
        %v1377 = vpop.f32.mrb[0].mxu0
        %v1378 = vadd.f32 0.0, %v1377
        %v1379 = vpop.f32.mrb[0].mxu0
        %1380 = vmatprep.mubr.f32.mxu0 0.0
        %1381 = vmatmul.mubr.f32.gmra.mrb[0].mxu0 %v1263
        %v1382 = vpop.f32.mrb[0].mxu0
        %v1383 = vadd.f32 0.0, %v1382
        %v1384 = vpop.f32.mrb[0].mxu0
        %1385 = vmatprep.mubr.f32.mxu0 0.0
        %1386 = vmatmul.mubr.f32.gmra.mrb[0].mxu0 %v1266
        %v1387 = vpop.f32.mrb[0].mxu0
        %v1388 = vadd.f32 0.0, %v1387
        %v1389 = vpop.f32.mrb[0].mxu0
        %1390 = vmatprep.mubr.f32.mxu0 0.0
        %1391 = vmatmul.mubr.f32.gmra.mrb[0].mxu0 %v1269
        %v1392 = vpop.f32.mrb[0].mxu0
        %v1393 = vadd.f32 0.0, %v1392
        %v1394 = vpop.f32.mrb[0].mxu0
        %1395 = vmatprep.mubr.f32.mxu0 0.0
        %1396 = vmatmul.mubr.f32.gmra.mrb[0].mxu0 %v1272
        %v1397 = vpop.f32.mrb[0].mxu0
        %v1398 = vadd.f32 0.0, %v1397
        %v1399 = vpop.f32.mrb[0].mxu0
        %1400 = vmatprep.mubr.f32.mxu0 0.0
        %1401 = vmatmul.mubr.f32.gmra.mrb[0].mxu0 %v1275
        %v1402 = vpop.f32.mrb[0].mxu0
        %v1403 = vadd.f32 0.0, %v1402
        %v1404 = vpop.f32.mrb[0].mxu0
        %1405 = vmatprep.mubr.f32.mxu0 0.0
        %1406 = vmatmul.mubr.f32.gmra.mrb[0].mxu0 %v1278
        %v1407 = vpop.f32.mrb[0].mxu0
        %v1408 = vadd.f32 0.0, %v1407
        %v1409 = vpop.f32.mrb[0].mxu0
        %1410 = vmatprep.mubr.f32.mxu0 0.0
        %1411 = vmatmul.mubr.f32.gmra.mrb[0].mxu0 %v1281
        %v1412 = vpop.f32.mrb[0].mxu0
        %v1413 = vadd.f32 0.0, %v1412
        %v1414 = vpop.f32.mrb[0].mxu0
        %1415 = vmatprep.mubr.f32.mxu0 0.0
        %1416 = vmatmul.mubr.f32.gmra.mrb[0].mxu0 %v1284
        %v1417 = vpop.f32.mrb[0].mxu0
        %v1418 = vadd.f32 0.0, %v1417
        %v1419 = vpop.f32.mrb[0].mxu0
        %1420 = vmatprep.mubr.f32.mxu0 0.0
        %1421 = vmatmul.mubr.f32.gmra.mrb[0].mxu0 %v1287
        %v1422 = vpop.f32.mrb[0].mxu0
        %v1423 = vadd.f32 0.0, %v1422
        %v1424 = vpop.f32.mrb[0].mxu0
        %1425 = vmatprep.mubr.f32.mxu0 0.0
        %1426 = vmatmul.mubr.f32.gmra.mrb[0].mxu0 %v1290
        %v1427 = vpop.f32.mrb[0].mxu0
        %v1428 = vadd.f32 0.0, %v1427
        %v1429 = vpop.f32.mrb[0].mxu0
        %1430 = vmatprep.mubr.f32.mxu0 0.0
        %1431 = vmatmul.mubr.f32.gmra.mrb[0].mxu0 %v1293
        %v1432 = vpop.f32.mrb[0].mxu0
        %v1433 = vadd.f32 0.0, %v1432
        %v1434 = vpop.f32.mrb[0].mxu0
        %1435 = vmatprep.mubr.f32.mxu0 0.0
        %1436 = vmatmul.mubr.f32.gmra.mrb[0].mxu0 %v1296
        %v1437 = vpop.f32.mrb[0].mxu0
        %v1438 = vadd.f32 0.0, %v1437
        %v1439 = vpop.f32.mrb[0].mxu0
        %1440 = vmatprep.mubr.f32.mxu0 0.0
        %1441 = vmatmul.mubr.f32.gmra.mrb[0].mxu0 %v1299
        %v1442 = vpop.f32.mrb[0].mxu0
        %v1443 = vadd.f32 0.0, %v1442
        %v1444 = vpop.f32.mrb[0].mxu0
        %1445 = vdwg.mxu0
        %v1446 = vsel %vm1206, %v1219, 0.0
        %v1447 = vrot.slane %v1446, 4
        %v1448 = vadd.f32 %v1446, %v1447
        %v1449 = vrot.slane %v1448, 2
        %v1450 = vadd.f32 %v1448, %v1449
        %v1451 = vrot.slane %v1450, 1
        %v1452 = vadd.f32 %v1450, %v1451
        %v1454 = vsel %vm1206, %v1219, 0
        %v1457 = vsel %vm1206, %v1113, 0
        %v1460 = vsel %vm1206, %v1114, 0
        %v1463 = vsel %vm1206, %v1115, 0
        %v1466 = vsel %vm1206, %v1116, 0
        %v1469 = vsel %vm1206, %v1117, 0
        %v1472 = vsel %vm1206, %v1118, 0
        %v1475 = vsel %vm1206, %v1119, 0
        %v1478 = vsel %vm1206, %v1120, 0
        %v1481 = vsel %vm1206, %v1121, 0
        %v1484 = vsel %vm1206, %v1122, 0
        %v1487 = vsel %vm1206, %v1123, 0
        %v1490 = vsel %vm1206, %v1124, 0
        %v1493 = vsel %vm1206, %v1125, 0
        %v1496 = vsel %vm1206, %v1126, 0
        %v1499 = vsel %vm1206, %v1127, 0
        %v1502 = vsel %vm1206, %v1128, 0
        %1504 = vmatprep.subr.mxu0 0.0
        %1505 = vmatpush1.xpose.msra.mxu0 %v1457
        %1506 = vmatprep.subr.mxu0 0.0
        %1507 = vmatpush1.xpose.msra.mxu0 %v1460
        %1508 = vmatprep.subr.mxu0 0.0
        %1509 = vmatpush1.xpose.msra.mxu0 %v1463
        %1510 = vmatprep.subr.mxu0 0.0
        %1511 = vmatpush1.xpose.msra.mxu0 %v1466
        %1512 = vmatprep.subr.mxu0 0.0
        %1513 = vmatpush1.xpose.msra.mxu0 %v1469
        %1514 = vmatprep.subr.mxu0 0.0
        %1515 = vmatpush1.xpose.msra.mxu0 %v1472
        %1516 = vmatprep.subr.mxu0 0.0
        %1517 = vmatpush1.xpose.msra.mxu0 %v1475
        %1518 = vmatprep.subr.mxu0 0.0
        %1519 = vmatpush1.xpose.msra.mxu0 %v1478
        %1520 = vmatprep.subr.mxu0 0.0
        %1521 = vmatpush1.xpose.msra.mxu0 %v1481
        %1522 = vmatprep.subr.mxu0 0.0
        %1523 = vmatpush1.xpose.msra.mxu0 %v1484
        %1524 = vmatprep.subr.mxu0 0.0
        %1525 = vmatpush1.xpose.msra.mxu0 %v1487
        %1526 = vmatprep.subr.mxu0 0.0
        %1527 = vmatpush1.xpose.msra.mxu0 %v1490
        %1528 = vmatprep.subr.mxu0 0.0
        %1529 = vmatpush1.xpose.msra.mxu0 %v1493
        %1530 = vmatprep.subr.mxu0 0.0
        %1531 = vmatpush1.xpose.msra.mxu0 %v1496
        %1532 = vmatprep.subr.mxu0 0.0
        %1533 = vmatpush1.xpose.msra.mxu0 %v1499
        %1534 = vmatprep.subr.mxu0 0.0
        %1535 = vmatpush1.xpose.msra.mxu0 %v1502
        %1536 = vmatprep.subr.mxu0 0.0
        %1537 = vmatpush1.xpose.msra.mxu0 0.0
        %1538 = vmatprep.subr.mxu0 0.0
        %1539 = vmatpush1.xpose.msra.mxu0 0.0
        %1540 = vmatprep.subr.mxu0 0.0
        %1541 = vmatpush1.xpose.msra.mxu0 0.0
        %1542 = vmatprep.subr.mxu0 0.0
        %1543 = vmatpush1.xpose.msra.mxu0 0.0
        %1544 = vmatprep.subr.mxu0 0.0
        %1545 = vmatpush1.xpose.msra.mxu0 0.0
        %1546 = vmatprep.subr.mxu0 0.0
        %1547 = vmatpush1.xpose.msra.mxu0 0.0
        %1548 = vmatprep.subr.mxu0 0.0
        %1549 = vmatpush1.xpose.msra.mxu0 0.0
        %1550 = vmatprep.subr.mxu0 0.0
        %1551 = vmatpush1.xpose.msra.mxu0 0.0
        %1552 = vmatprep.subr.mxu0 0.0
        %1553 = vmatpush1.xpose.msra.mxu0 0.0
        %1554 = vmatprep.subr.mxu0 0.0
        %1555 = vmatpush1.xpose.msra.mxu0 0.0
        %1556 = vmatprep.subr.mxu0 0.0
        %1557 = vmatpush1.xpose.msra.mxu0 0.0
        %1558 = vmatprep.subr.mxu0 0.0
        %1559 = vmatpush1.xpose.msra.mxu0 0.0
        %1560 = vmatprep.subr.mxu0 0.0
        %1561 = vmatpush1.xpose.msra.mxu0 0.0
        %1562 = vmatprep.subr.mxu0 0.0
        %1563 = vmatpush1.xpose.msra.mxu0 0.0
        %1564 = vmatprep.subr.mxu0 0.0
        %1565 = vmatpush1.xpose.msra.mxu0 0.0
        %1566 = vmatprep.subr.mxu0 0.0
        %1567 = vmatpush1.xpose.msra.mxu0 0.0
        %1568 = vmatprep.mubr.f32.mxu0 0.0
        %1569 = vmatmul.mubr.f32.gmra.mrb[0].mxu0 %v1454
        %v1570 = vpop.f32.mrb[0].mxu0
        %v1571 = vadd.f32 0.0, %v1570
        %v1572 = vpop.f32.mrb[0].mxu0
        %1573 = vdwg.mxu0
        %1574 = vxpose.xlu0.b32.start [1/16] %v1007, 128
        %1575 = vxpose.xlu0.b32.cont [2/16] 0.0, 128
        %1576 = vxpose.xlu0.b32.cont [3/16] 0.0, 128
        %1577 = vxpose.xlu0.b32.cont [4/16] 0.0, 128
        %1578 = vxpose.xlu0.b32.cont [5/16] 0.0, 128
        %1579 = vxpose.xlu0.b32.cont [6/16] 0.0, 128
        %1580 = vxpose.xlu0.b32.cont [7/16] 0.0, 128
        %1581 = vxpose.xlu0.b32.cont [8/16] 0.0, 128
        %1582 = vxpose.xlu0.b32.cont [9/16] 0.0, 128
        %1583 = vxpose.xlu0.b32.cont [10/16] 0.0, 128
        %1584 = vxpose.xlu0.b32.cont [11/16] 0.0, 128
        %1585 = vxpose.xlu0.b32.cont [12/16] 0.0, 128
        %1586 = vxpose.xlu0.b32.cont [13/16] 0.0, 128
        %1587 = vxpose.xlu0.b32.cont [14/16] 0.0, 128
        %1588 = vxpose.xlu0.b32.cont [15/16] 0.0, 128
        %1589 = vxpose.xlu0.b32.end [16/16] 0.0, 128
        %v1590 = vpop.trf.xlu0
        %v1591 = vpop.trf.xlu0
        %v1592 = vpop.trf.xlu0
        %v1593 = vpop.trf.xlu0
        %v1594 = vpop.trf.xlu0
        %v1595 = vpop.trf.xlu0
        %v1596 = vpop.trf.xlu0
        %v1597 = vpop.trf.xlu0
        %v1598 = vpop.trf.xlu0
        %v1599 = vpop.trf.xlu0
        %v1600 = vpop.trf.xlu0
        %v1601 = vpop.trf.xlu0
        %v1602 = vpop.trf.xlu0
        %v1603 = vpop.trf.xlu0
        %v1604 = vpop.trf.xlu0
        %v1605 = vpop.trf.xlu0
        %v1607 = vsel %vm1252, %v1590, 0
        %v1610 = vsel %vm1252, %v1591, 0
        %v1613 = vsel %vm1252, %v1592, 0
        %v1616 = vsel %vm1252, %v1593, 0
        %v1619 = vsel %vm1252, %v1594, 0
        %v1622 = vsel %vm1252, %v1595, 0
        %v1625 = vsel %vm1252, %v1596, 0
        %v1628 = vsel %vm1252, %v1597, 0
        %v1631 = vsel %vm1252, %v1598, 0
        %v1634 = vsel %vm1252, %v1599, 0
        %v1637 = vsel %vm1252, %v1600, 0
        %v1640 = vsel %vm1252, %v1601, 0
        %v1643 = vsel %vm1252, %v1602, 0
        %v1646 = vsel %vm1252, %v1603, 0
        %v1649 = vsel %vm1252, %v1604, 0
        %v1652 = vsel %vm1252, %v1605, 0
        %1654 = vmatprep.subr.mxu0 0.0
        %1655 = vmatpush1.msra.mxu0 %v1571
        %1656 = vmatprep.subr.mxu0 0.0
        %1657 = vmatpush1.msra.mxu0 0.0
        %1658 = vmatprep.subr.mxu0 0.0
        %1659 = vmatpush1.msra.mxu0 0.0
        %1660 = vmatprep.subr.mxu0 0.0
        %1661 = vmatpush1.msra.mxu0 0.0
        %1662 = vmatprep.subr.mxu0 0.0
        %1663 = vmatpush1.msra.mxu0 0.0
        %1664 = vmatprep.subr.mxu0 0.0
        %1665 = vmatpush1.msra.mxu0 0.0
        %1666 = vmatprep.subr.mxu0 0.0
        %1667 = vmatpush1.msra.mxu0 0.0
        %1668 = vmatprep.subr.mxu0 0.0
        %1669 = vmatpush1.msra.mxu0 0.0
        %1670 = vmatprep.subr.mxu0 0.0
        %1671 = vmatpush1.msra.mxu0 0.0
        %1672 = vmatprep.subr.mxu0 0.0
        %1673 = vmatpush1.msra.mxu0 0.0
        %1674 = vmatprep.subr.mxu0 0.0
        %1675 = vmatpush1.msra.mxu0 0.0
        %1676 = vmatprep.subr.mxu0 0.0
        %1677 = vmatpush1.msra.mxu0 0.0
        %1678 = vmatprep.subr.mxu0 0.0
        %1679 = vmatpush1.msra.mxu0 0.0
        %1680 = vmatprep.subr.mxu0 0.0
        %1681 = vmatpush1.msra.mxu0 0.0
        %1682 = vmatprep.subr.mxu0 0.0
        %1683 = vmatpush1.msra.mxu0 0.0
        %1684 = vmatprep.subr.mxu0 0.0
        %1685 = vmatpush1.msra.mxu0 0.0
        %1686 = vmatprep.subr.mxu0 0.0
        %1687 = vmatpush1.msra.mxu0 0.0
        %1688 = vmatprep.subr.mxu0 0.0
        %1689 = vmatpush1.msra.mxu0 0.0
        %1690 = vmatprep.subr.mxu0 0.0
        %1691 = vmatpush1.msra.mxu0 0.0
        %1692 = vmatprep.subr.mxu0 0.0
        %1693 = vmatpush1.msra.mxu0 0.0
        %1694 = vmatprep.subr.mxu0 0.0
        %1695 = vmatpush1.msra.mxu0 0.0
        %1696 = vmatprep.subr.mxu0 0.0
        %1697 = vmatpush1.msra.mxu0 0.0
        %1698 = vmatprep.subr.mxu0 0.0
        %1699 = vmatpush1.msra.mxu0 0.0
        %1700 = vmatprep.subr.mxu0 0.0
        %1701 = vmatpush1.msra.mxu0 0.0
        %1702 = vmatprep.subr.mxu0 0.0
        %1703 = vmatpush1.msra.mxu0 0.0
        %1704 = vmatprep.subr.mxu0 0.0
        %1705 = vmatpush1.msra.mxu0 0.0
        %1706 = vmatprep.subr.mxu0 0.0
        %1707 = vmatpush1.msra.mxu0 0.0
        %1708 = vmatprep.subr.mxu0 0.0
        %1709 = vmatpush1.msra.mxu0 0.0
        %1710 = vmatprep.subr.mxu0 0.0
        %1711 = vmatpush1.msra.mxu0 0.0
        %1712 = vmatprep.subr.mxu0 0.0
        %1713 = vmatpush1.msra.mxu0 0.0
        %1714 = vmatprep.subr.mxu0 0.0
        %1715 = vmatpush1.msra.mxu0 0.0
        %1716 = vmatprep.subr.mxu0 0.0
        %1717 = vmatpush1.msra.mxu0 0.0
        %1718 = vmatprep.mubr.f32.mxu0 0.0
        %1719 = vmatmul.mubr.f32.gmra.mrb[0].mxu0 %v1607
        %v1720 = vpop.f32.mrb[0].mxu0
        %v1721 = vadd.f32 0.0, %v1720
        %v1722 = vpop.f32.mrb[0].mxu0
        %1723 = vmatprep.mubr.f32.mxu0 0.0
        %1724 = vmatmul.mubr.f32.gmra.mrb[0].mxu0 %v1610
        %v1725 = vpop.f32.mrb[0].mxu0
        %v1726 = vadd.f32 0.0, %v1725
        %v1727 = vpop.f32.mrb[0].mxu0
        %1728 = vmatprep.mubr.f32.mxu0 0.0
        %1729 = vmatmul.mubr.f32.gmra.mrb[0].mxu0 %v1613
        %v1730 = vpop.f32.mrb[0].mxu0
        %v1731 = vadd.f32 0.0, %v1730
        %v1732 = vpop.f32.mrb[0].mxu0
        %1733 = vmatprep.mubr.f32.mxu0 0.0
        %1734 = vmatmul.mubr.f32.gmra.mrb[0].mxu0 %v1616
        %v1735 = vpop.f32.mrb[0].mxu0
        %v1736 = vadd.f32 0.0, %v1735
        %v1737 = vpop.f32.mrb[0].mxu0
        %1738 = vmatprep.mubr.f32.mxu0 0.0
        %1739 = vmatmul.mubr.f32.gmra.mrb[0].mxu0 %v1619
        %v1740 = vpop.f32.mrb[0].mxu0
        %v1741 = vadd.f32 0.0, %v1740
        %v1742 = vpop.f32.mrb[0].mxu0
        %1743 = vmatprep.mubr.f32.mxu0 0.0
        %1744 = vmatmul.mubr.f32.gmra.mrb[0].mxu0 %v1622
        %v1745 = vpop.f32.mrb[0].mxu0
        %v1746 = vadd.f32 0.0, %v1745
        %v1747 = vpop.f32.mrb[0].mxu0
        %1748 = vmatprep.mubr.f32.mxu0 0.0
        %1749 = vmatmul.mubr.f32.gmra.mrb[0].mxu0 %v1625
        %v1750 = vpop.f32.mrb[0].mxu0
        %v1751 = vadd.f32 0.0, %v1750
        %v1752 = vpop.f32.mrb[0].mxu0
        %1753 = vmatprep.mubr.f32.mxu0 0.0
        %1754 = vmatmul.mubr.f32.gmra.mrb[0].mxu0 %v1628
        %v1755 = vpop.f32.mrb[0].mxu0
        %v1756 = vadd.f32 0.0, %v1755
        %v1757 = vpop.f32.mrb[0].mxu0
        %1758 = vmatprep.mubr.f32.mxu0 0.0
        %1759 = vmatmul.mubr.f32.gmra.mrb[0].mxu0 %v1631
        %v1760 = vpop.f32.mrb[0].mxu0
        %v1761 = vadd.f32 0.0, %v1760
        %v1762 = vpop.f32.mrb[0].mxu0
        %1763 = vmatprep.mubr.f32.mxu0 0.0
        %1764 = vmatmul.mubr.f32.gmra.mrb[0].mxu0 %v1634
        %v1765 = vpop.f32.mrb[0].mxu0
        %v1766 = vadd.f32 0.0, %v1765
        %v1767 = vpop.f32.mrb[0].mxu0
        %1768 = vmatprep.mubr.f32.mxu0 0.0
        %1769 = vmatmul.mubr.f32.gmra.mrb[0].mxu0 %v1637
        %v1770 = vpop.f32.mrb[0].mxu0
        %v1771 = vadd.f32 0.0, %v1770
        %v1772 = vpop.f32.mrb[0].mxu0
        %1773 = vmatprep.mubr.f32.mxu0 0.0
        %1774 = vmatmul.mubr.f32.gmra.mrb[0].mxu0 %v1640
        %v1775 = vpop.f32.mrb[0].mxu0
        %v1776 = vadd.f32 0.0, %v1775
        %v1777 = vpop.f32.mrb[0].mxu0
        %1778 = vmatprep.mubr.f32.mxu0 0.0
        %1779 = vmatmul.mubr.f32.gmra.mrb[0].mxu0 %v1643
        %v1780 = vpop.f32.mrb[0].mxu0
        %v1781 = vadd.f32 0.0, %v1780
        %v1782 = vpop.f32.mrb[0].mxu0
        %1783 = vmatprep.mubr.f32.mxu0 0.0
        %1784 = vmatmul.mubr.f32.gmra.mrb[0].mxu0 %v1646
        %v1785 = vpop.f32.mrb[0].mxu0
        %v1786 = vadd.f32 0.0, %v1785
        %v1787 = vpop.f32.mrb[0].mxu0
        %1788 = vmatprep.mubr.f32.mxu0 0.0
        %1789 = vmatmul.mubr.f32.gmra.mrb[0].mxu0 %v1649
        %v1790 = vpop.f32.mrb[0].mxu0
        %v1791 = vadd.f32 0.0, %v1790
        %v1792 = vpop.f32.mrb[0].mxu0
        %1793 = vmatprep.mubr.f32.mxu0 0.0
        %1794 = vmatmul.mubr.f32.gmra.mrb[0].mxu0 %v1652
        %v1795 = vpop.f32.mrb[0].mxu0
        %v1796 = vadd.f32 0.0, %v1795
        %v1797 = vpop.f32.mrb[0].mxu0
        %1798 = vdwg.mxu0
        %1799 = vmatprep.subr.mxu0 0.0
        %1800 = vmatpush1.xpose.msra.mxu0 %v1010
        %1801 = vmatprep.subr.mxu0 0.0
        %1802 = vmatpush1.xpose.msra.mxu0 %v1011
        %1803 = vmatprep.subr.mxu0 0.0
        %1804 = vmatpush1.xpose.msra.mxu0 %v1012
        %1805 = vmatprep.subr.mxu0 0.0
        %1806 = vmatpush1.xpose.msra.mxu0 %v1013
        %1807 = vmatprep.subr.mxu0 0.0
        %1808 = vmatpush1.xpose.msra.mxu0 %v1014
        %1809 = vmatprep.subr.mxu0 0.0
        %1810 = vmatpush1.xpose.msra.mxu0 %v1015
        %1811 = vmatprep.subr.mxu0 0.0
        %1812 = vmatpush1.xpose.msra.mxu0 %v1016
        %1813 = vmatprep.subr.mxu0 0.0
        %1814 = vmatpush1.xpose.msra.mxu0 %v1017
        %1815 = vmatprep.subr.mxu0 0.0
        %1816 = vmatpush1.xpose.msra.mxu0 %v1018
        %1817 = vmatprep.subr.mxu0 0.0
        %1818 = vmatpush1.xpose.msra.mxu0 %v1019
        %1819 = vmatprep.subr.mxu0 0.0
        %1820 = vmatpush1.xpose.msra.mxu0 %v1020
        %1821 = vmatprep.subr.mxu0 0.0
        %1822 = vmatpush1.xpose.msra.mxu0 %v1021
        %1823 = vmatprep.subr.mxu0 0.0
        %1824 = vmatpush1.xpose.msra.mxu0 %v1022
        %1825 = vmatprep.subr.mxu0 0.0
        %1826 = vmatpush1.xpose.msra.mxu0 %v1023
        %1827 = vmatprep.subr.mxu0 0.0
        %1828 = vmatpush1.xpose.msra.mxu0 %v1024
        %1829 = vmatprep.subr.mxu0 0.0
        %1830 = vmatpush1.xpose.msra.mxu0 %v1025
        %1831 = vmatprep.subr.mxu0 0.0
        %1832 = vmatpush1.xpose.msra.mxu0 0.0
        %1833 = vmatprep.subr.mxu0 0.0
        %1834 = vmatpush1.xpose.msra.mxu0 0.0
        %1835 = vmatprep.subr.mxu0 0.0
        %1836 = vmatpush1.xpose.msra.mxu0 0.0
        %1837 = vmatprep.subr.mxu0 0.0
        %1838 = vmatpush1.xpose.msra.mxu0 0.0
        %1839 = vmatprep.subr.mxu0 0.0
        %1840 = vmatpush1.xpose.msra.mxu0 0.0
        %1841 = vmatprep.subr.mxu0 0.0
        %1842 = vmatpush1.xpose.msra.mxu0 0.0
        %1843 = vmatprep.subr.mxu0 0.0
        %1844 = vmatpush1.xpose.msra.mxu0 0.0
        %1845 = vmatprep.subr.mxu0 0.0
        %1846 = vmatpush1.xpose.msra.mxu0 0.0
        %1847 = vmatprep.subr.mxu0 0.0
        %1848 = vmatpush1.xpose.msra.mxu0 0.0
        %1849 = vmatprep.subr.mxu0 0.0
        %1850 = vmatpush1.xpose.msra.mxu0 0.0
        %1851 = vmatprep.subr.mxu0 0.0
        %1852 = vmatpush1.xpose.msra.mxu0 0.0
        %1853 = vmatprep.subr.mxu0 0.0
        %1854 = vmatpush1.xpose.msra.mxu0 0.0
        %1855 = vmatprep.subr.mxu0 0.0
        %1856 = vmatpush1.xpose.msra.mxu0 0.0
        %1857 = vmatprep.subr.mxu0 0.0
        %1858 = vmatpush1.xpose.msra.mxu0 0.0
        %1859 = vmatprep.subr.mxu0 0.0
        %1860 = vmatpush1.xpose.msra.mxu0 0.0
        %1861 = vmatprep.subr.mxu0 0.0
        %1862 = vmatpush1.xpose.msra.mxu0 0.0
        %1863 = vmatprep.mubr.f32.mxu0 0.0
        %1864 = vmatmul.mubr.f32.gmra.mrb[0].mxu0 %v1571
        %v1865 = vpop.f32.mrb[0].mxu0
        %v1866 = vadd.f32 0.0, %v1865
        %v1867 = vpop.f32.mrb[0].mxu0
        %1868 = vdwg.mxu0
        %1869 = vxpose.xlu0.b32.start [1/16] %v938, 128
        %1870 = vxpose.xlu0.b32.cont [2/16] 0.0, 128
        %1871 = vxpose.xlu0.b32.cont [3/16] 0.0, 128
        %1872 = vxpose.xlu0.b32.cont [4/16] 0.0, 128
        %1873 = vxpose.xlu0.b32.cont [5/16] 0.0, 128
        %1874 = vxpose.xlu0.b32.cont [6/16] 0.0, 128
        %1875 = vxpose.xlu0.b32.cont [7/16] 0.0, 128
        %1876 = vxpose.xlu0.b32.cont [8/16] 0.0, 128
        %1877 = vxpose.xlu0.b32.cont [9/16] 0.0, 128
        %1878 = vxpose.xlu0.b32.cont [10/16] 0.0, 128
        %1879 = vxpose.xlu0.b32.cont [11/16] 0.0, 128
        %1880 = vxpose.xlu0.b32.cont [12/16] 0.0, 128
        %1881 = vxpose.xlu0.b32.cont [13/16] 0.0, 128
        %1882 = vxpose.xlu0.b32.cont [14/16] 0.0, 128
        %1883 = vxpose.xlu0.b32.cont [15/16] 0.0, 128
        %1884 = vxpose.xlu0.b32.end [16/16] 0.0, 128
        %v1885 = vpop.trf.xlu0
        %v1886 = vpop.trf.xlu0
        %v1887 = vpop.trf.xlu0
        %v1888 = vpop.trf.xlu0
        %v1889 = vpop.trf.xlu0
        %v1890 = vpop.trf.xlu0
        %v1891 = vpop.trf.xlu0
        %v1892 = vpop.trf.xlu0
        %v1893 = vpop.trf.xlu0
        %v1894 = vpop.trf.xlu0
        %v1895 = vpop.trf.xlu0
        %v1896 = vpop.trf.xlu0
        %v1897 = vpop.trf.xlu0
        %v1898 = vpop.trf.xlu0
        %v1899 = vpop.trf.xlu0
        %v1900 = vpop.trf.xlu0
        %1901 = vxpose.xlu0.b32.start [1/16] %v939, 128
        %1902 = vxpose.xlu0.b32.cont [2/16] 0.0, 128
        %1903 = vxpose.xlu0.b32.cont [3/16] 0.0, 128
        %1904 = vxpose.xlu0.b32.cont [4/16] 0.0, 128
        %1905 = vxpose.xlu0.b32.cont [5/16] 0.0, 128
        %1906 = vxpose.xlu0.b32.cont [6/16] 0.0, 128
        %1907 = vxpose.xlu0.b32.cont [7/16] 0.0, 128
        %1908 = vxpose.xlu0.b32.cont [8/16] 0.0, 128
        %1909 = vxpose.xlu0.b32.cont [9/16] 0.0, 128
        %1910 = vxpose.xlu0.b32.cont [10/16] 0.0, 128
        %1911 = vxpose.xlu0.b32.cont [11/16] 0.0, 128
        %1912 = vxpose.xlu0.b32.cont [12/16] 0.0, 128
        %1913 = vxpose.xlu0.b32.cont [13/16] 0.0, 128
        %1914 = vxpose.xlu0.b32.cont [14/16] 0.0, 128
        %1915 = vxpose.xlu0.b32.cont [15/16] 0.0, 128
        %1916 = vxpose.xlu0.b32.end [16/16] 0.0, 128
        %v1917 = vpop.trf.xlu0
        %v1918 = vpop.trf.xlu0
        %v1919 = vpop.trf.xlu0
        %v1920 = vpop.trf.xlu0
        %v1921 = vpop.trf.xlu0
        %v1922 = vpop.trf.xlu0
        %v1923 = vpop.trf.xlu0
        %v1924 = vpop.trf.xlu0
        %v1925 = vpop.trf.xlu0
        %v1926 = vpop.trf.xlu0
        %v1927 = vpop.trf.xlu0
        %v1928 = vpop.trf.xlu0
        %v1929 = vpop.trf.xlu0
        %v1930 = vpop.trf.xlu0
        %v1931 = vpop.trf.xlu0
        %v1932 = vpop.trf.xlu0
        %v1934 = vsel %vm1252, %v1885, 0
        %v1937 = vsel %vm1252, %v1886, 0
        %v1940 = vsel %vm1252, %v1887, 0
        %v1943 = vsel %vm1252, %v1888, 0
        %v1946 = vsel %vm1252, %v1889, 0
        %v1949 = vsel %vm1252, %v1890, 0
        %v1952 = vsel %vm1252, %v1891, 0
        %v1955 = vsel %vm1252, %v1892, 0
        %v1958 = vsel %vm1252, %v1893, 0
        %v1961 = vsel %vm1252, %v1894, 0
        %v1964 = vsel %vm1252, %v1895, 0
        %v1967 = vsel %vm1252, %v1896, 0
        %v1970 = vsel %vm1252, %v1897, 0
        %v1973 = vsel %vm1252, %v1898, 0
        %v1976 = vsel %vm1252, %v1899, 0
        %v1979 = vsel %vm1252, %v1900, 0
        %v1982 = vsel %vm1252, %v1917, 0
        %v1985 = vsel %vm1252, %v1918, 0
        %v1988 = vsel %vm1252, %v1919, 0
        %v1991 = vsel %vm1252, %v1920, 0
        %v1994 = vsel %vm1252, %v1921, 0
        %v1997 = vsel %vm1252, %v1922, 0
        %v2000 = vsel %vm1252, %v1923, 0
        %v2003 = vsel %vm1252, %v1924, 0
        %v2006 = vsel %vm1252, %v1925, 0
        %v2009 = vsel %vm1252, %v1926, 0
        %v2012 = vsel %vm1252, %v1927, 0
        %v2015 = vsel %vm1252, %v1928, 0
        %v2018 = vsel %vm1252, %v1929, 0
        %v2021 = vsel %vm1252, %v1930, 0
        %v2024 = vsel %vm1252, %v1931, 0
        %v2027 = vsel %vm1252, %v1932, 0
        %2029 = vmatprep.subr.mxu0 0.0
        %2030 = vmatpush1.msra.mxu0 %v1866
        %2031 = vmatprep.subr.mxu0 0.0
        %2032 = vmatpush1.msra.mxu0 0.0
        %2033 = vmatprep.subr.mxu0 0.0
        %2034 = vmatpush1.msra.mxu0 0.0
        %2035 = vmatprep.subr.mxu0 0.0
        %2036 = vmatpush1.msra.mxu0 0.0
        %2037 = vmatprep.subr.mxu0 0.0
        %2038 = vmatpush1.msra.mxu0 0.0
        %2039 = vmatprep.subr.mxu0 0.0
        %2040 = vmatpush1.msra.mxu0 0.0
        %2041 = vmatprep.subr.mxu0 0.0
        %2042 = vmatpush1.msra.mxu0 0.0
        %2043 = vmatprep.subr.mxu0 0.0
        %2044 = vmatpush1.msra.mxu0 0.0
        %2045 = vmatprep.subr.mxu0 0.0
        %2046 = vmatpush1.msra.mxu0 0.0
        %2047 = vmatprep.subr.mxu0 0.0
        %2048 = vmatpush1.msra.mxu0 0.0
        %2049 = vmatprep.subr.mxu0 0.0
        %2050 = vmatpush1.msra.mxu0 0.0
        %2051 = vmatprep.subr.mxu0 0.0
        %2052 = vmatpush1.msra.mxu0 0.0
        %2053 = vmatprep.subr.mxu0 0.0
        %2054 = vmatpush1.msra.mxu0 0.0
        %2055 = vmatprep.subr.mxu0 0.0
        %2056 = vmatpush1.msra.mxu0 0.0
        %2057 = vmatprep.subr.mxu0 0.0
        %2058 = vmatpush1.msra.mxu0 0.0
        %2059 = vmatprep.subr.mxu0 0.0
        %2060 = vmatpush1.msra.mxu0 0.0
        %2061 = vmatprep.subr.mxu0 0.0
        %2062 = vmatpush1.msra.mxu0 0.0
        %2063 = vmatprep.subr.mxu0 0.0
        %2064 = vmatpush1.msra.mxu0 0.0
        %2065 = vmatprep.subr.mxu0 0.0
        %2066 = vmatpush1.msra.mxu0 0.0
        %2067 = vmatprep.subr.mxu0 0.0
        %2068 = vmatpush1.msra.mxu0 0.0
        %2069 = vmatprep.subr.mxu0 0.0
        %2070 = vmatpush1.msra.mxu0 0.0
        %2071 = vmatprep.subr.mxu0 0.0
        %2072 = vmatpush1.msra.mxu0 0.0
        %2073 = vmatprep.subr.mxu0 0.0
        %2074 = vmatpush1.msra.mxu0 0.0
        %2075 = vmatprep.subr.mxu0 0.0
        %2076 = vmatpush1.msra.mxu0 0.0
        %2077 = vmatprep.subr.mxu0 0.0
        %2078 = vmatpush1.msra.mxu0 0.0
        %2079 = vmatprep.subr.mxu0 0.0
        %2080 = vmatpush1.msra.mxu0 0.0
        %2081 = vmatprep.subr.mxu0 0.0
        %2082 = vmatpush1.msra.mxu0 0.0
        %2083 = vmatprep.subr.mxu0 0.0
        %2084 = vmatpush1.msra.mxu0 0.0
        %2085 = vmatprep.subr.mxu0 0.0
        %2086 = vmatpush1.msra.mxu0 0.0
        %2087 = vmatprep.subr.mxu0 0.0
        %2088 = vmatpush1.msra.mxu0 0.0
        %2089 = vmatprep.subr.mxu0 0.0
        %2090 = vmatpush1.msra.mxu0 0.0
        %2091 = vmatprep.subr.mxu0 0.0
        %2092 = vmatpush1.msra.mxu0 0.0
        %2093 = vmatprep.mubr.f32.mxu0 0.0
        %2094 = vmatmul.mubr.f32.gmra.mrb[0].mxu0 %v1934
        %v2095 = vpop.f32.mrb[0].mxu0
        %v2096 = vadd.f32 0.0, %v2095
        %v2097 = vpop.f32.mrb[0].mxu0
        %2098 = vmatprep.mubr.f32.mxu0 0.0
        %2099 = vmatmul.mubr.f32.gmra.mrb[0].mxu0 %v1937
        %v2100 = vpop.f32.mrb[0].mxu0
        %v2101 = vadd.f32 0.0, %v2100
        %v2102 = vpop.f32.mrb[0].mxu0
        %2103 = vmatprep.mubr.f32.mxu0 0.0
        %2104 = vmatmul.mubr.f32.gmra.mrb[0].mxu0 %v1940
        %v2105 = vpop.f32.mrb[0].mxu0
        %v2106 = vadd.f32 0.0, %v2105
        %v2107 = vpop.f32.mrb[0].mxu0
        %2108 = vmatprep.mubr.f32.mxu0 0.0
        %2109 = vmatmul.mubr.f32.gmra.mrb[0].mxu0 %v1943
        %v2110 = vpop.f32.mrb[0].mxu0
        %v2111 = vadd.f32 0.0, %v2110
        %v2112 = vpop.f32.mrb[0].mxu0
        %2113 = vmatprep.mubr.f32.mxu0 0.0
        %2114 = vmatmul.mubr.f32.gmra.mrb[0].mxu0 %v1946
        %v2115 = vpop.f32.mrb[0].mxu0
        %v2116 = vadd.f32 0.0, %v2115
        %v2117 = vpop.f32.mrb[0].mxu0
        %2118 = vmatprep.mubr.f32.mxu0 0.0
        %2119 = vmatmul.mubr.f32.gmra.mrb[0].mxu0 %v1949
        %v2120 = vpop.f32.mrb[0].mxu0
        %v2121 = vadd.f32 0.0, %v2120
        %v2122 = vpop.f32.mrb[0].mxu0
        %2123 = vmatprep.mubr.f32.mxu0 0.0
        %2124 = vmatmul.mubr.f32.gmra.mrb[0].mxu0 %v1952
        %v2125 = vpop.f32.mrb[0].mxu0
        %v2126 = vadd.f32 0.0, %v2125
        %v2127 = vpop.f32.mrb[0].mxu0
        %2128 = vmatprep.mubr.f32.mxu0 0.0
        %2129 = vmatmul.mubr.f32.gmra.mrb[0].mxu0 %v1955
        %v2130 = vpop.f32.mrb[0].mxu0
        %v2131 = vadd.f32 0.0, %v2130
        %v2132 = vpop.f32.mrb[0].mxu0
        %2133 = vmatprep.mubr.f32.mxu0 0.0
        %2134 = vmatmul.mubr.f32.gmra.mrb[0].mxu0 %v1958
        %v2135 = vpop.f32.mrb[0].mxu0
        %v2136 = vadd.f32 0.0, %v2135
        %v2137 = vpop.f32.mrb[0].mxu0
        %2138 = vmatprep.mubr.f32.mxu0 0.0
        %2139 = vmatmul.mubr.f32.gmra.mrb[0].mxu0 %v1961
        %v2140 = vpop.f32.mrb[0].mxu0
        %v2141 = vadd.f32 0.0, %v2140
        %v2142 = vpop.f32.mrb[0].mxu0
        %2143 = vmatprep.mubr.f32.mxu0 0.0
        %2144 = vmatmul.mubr.f32.gmra.mrb[0].mxu0 %v1964
        %v2145 = vpop.f32.mrb[0].mxu0
        %v2146 = vadd.f32 0.0, %v2145
        %v2147 = vpop.f32.mrb[0].mxu0
        %2148 = vmatprep.mubr.f32.mxu0 0.0
        %2149 = vmatmul.mubr.f32.gmra.mrb[0].mxu0 %v1967
        %v2150 = vpop.f32.mrb[0].mxu0
        %v2151 = vadd.f32 0.0, %v2150
        %v2152 = vpop.f32.mrb[0].mxu0
        %2153 = vmatprep.mubr.f32.mxu0 0.0
        %2154 = vmatmul.mubr.f32.gmra.mrb[0].mxu0 %v1970
        %v2155 = vpop.f32.mrb[0].mxu0
        %v2156 = vadd.f32 0.0, %v2155
        %v2157 = vpop.f32.mrb[0].mxu0
        %2158 = vmatprep.mubr.f32.mxu0 0.0
        %2159 = vmatmul.mubr.f32.gmra.mrb[0].mxu0 %v1973
        %v2160 = vpop.f32.mrb[0].mxu0
        %v2161 = vadd.f32 0.0, %v2160
        %v2162 = vpop.f32.mrb[0].mxu0
        %2163 = vmatprep.mubr.f32.mxu0 0.0
        %2164 = vmatmul.mubr.f32.gmra.mrb[0].mxu0 %v1976
        %v2165 = vpop.f32.mrb[0].mxu0
        %v2166 = vadd.f32 0.0, %v2165
        %v2167 = vpop.f32.mrb[0].mxu0
        %2168 = vmatprep.mubr.f32.mxu0 0.0
        %2169 = vmatmul.mubr.f32.gmra.mrb[0].mxu0 %v1979
        %v2170 = vpop.f32.mrb[0].mxu0
        %v2171 = vadd.f32 0.0, %v2170
        %v2172 = vpop.f32.mrb[0].mxu0
        %2173 = vmatprep.mubr.f32.mxu0 0.0
        %2174 = vmatmul.mubr.f32.gmra.mrb[0].mxu0 %v1982
        %v2175 = vpop.f32.mrb[0].mxu0
        %v2176 = vadd.f32 0.0, %v2175
        %v2177 = vpop.f32.mrb[0].mxu0
        %2178 = vmatprep.mubr.f32.mxu0 0.0
        %2179 = vmatmul.mubr.f32.gmra.mrb[0].mxu0 %v1985
        %v2180 = vpop.f32.mrb[0].mxu0
        %v2181 = vadd.f32 0.0, %v2180
        %v2182 = vpop.f32.mrb[0].mxu0
        %2183 = vmatprep.mubr.f32.mxu0 0.0
        %2184 = vmatmul.mubr.f32.gmra.mrb[0].mxu0 %v1988
        %v2185 = vpop.f32.mrb[0].mxu0
        %v2186 = vadd.f32 0.0, %v2185
        %v2187 = vpop.f32.mrb[0].mxu0
        %2188 = vmatprep.mubr.f32.mxu0 0.0
        %2189 = vmatmul.mubr.f32.gmra.mrb[0].mxu0 %v1991
        %v2190 = vpop.f32.mrb[0].mxu0
        %v2191 = vadd.f32 0.0, %v2190
        %v2192 = vpop.f32.mrb[0].mxu0
        %2193 = vmatprep.mubr.f32.mxu0 0.0
        %2194 = vmatmul.mubr.f32.gmra.mrb[0].mxu0 %v1994
        %v2195 = vpop.f32.mrb[0].mxu0
        %v2196 = vadd.f32 0.0, %v2195
        %v2197 = vpop.f32.mrb[0].mxu0
        %2198 = vmatprep.mubr.f32.mxu0 0.0
        %2199 = vmatmul.mubr.f32.gmra.mrb[0].mxu0 %v1997
        %v2200 = vpop.f32.mrb[0].mxu0
        %v2201 = vadd.f32 0.0, %v2200
        %v2202 = vpop.f32.mrb[0].mxu0
        %2203 = vmatprep.mubr.f32.mxu0 0.0
        %2204 = vmatmul.mubr.f32.gmra.mrb[0].mxu0 %v2000
        %v2205 = vpop.f32.mrb[0].mxu0
        %v2206 = vadd.f32 0.0, %v2205
        %v2207 = vpop.f32.mrb[0].mxu0
        %2208 = vmatprep.mubr.f32.mxu0 0.0
        %2209 = vmatmul.mubr.f32.gmra.mrb[0].mxu0 %v2003
        %v2210 = vpop.f32.mrb[0].mxu0
        %v2211 = vadd.f32 0.0, %v2210
        %v2212 = vpop.f32.mrb[0].mxu0
        %2213 = vmatprep.mubr.f32.mxu0 0.0
        %2214 = vmatmul.mubr.f32.gmra.mrb[0].mxu0 %v2006
        %v2215 = vpop.f32.mrb[0].mxu0
        %v2216 = vadd.f32 0.0, %v2215
        %v2217 = vpop.f32.mrb[0].mxu0
        %2218 = vmatprep.mubr.f32.mxu0 0.0
        %2219 = vmatmul.mubr.f32.gmra.mrb[0].mxu0 %v2009
        %v2220 = vpop.f32.mrb[0].mxu0
        %v2221 = vadd.f32 0.0, %v2220
        %v2222 = vpop.f32.mrb[0].mxu0
        %2223 = vmatprep.mubr.f32.mxu0 0.0
        %2224 = vmatmul.mubr.f32.gmra.mrb[0].mxu0 %v2012
        %v2225 = vpop.f32.mrb[0].mxu0
        %v2226 = vadd.f32 0.0, %v2225
        %v2227 = vpop.f32.mrb[0].mxu0
        %2228 = vmatprep.mubr.f32.mxu0 0.0
        %2229 = vmatmul.mubr.f32.gmra.mrb[0].mxu0 %v2015
        %v2230 = vpop.f32.mrb[0].mxu0
        %v2231 = vadd.f32 0.0, %v2230
        %v2232 = vpop.f32.mrb[0].mxu0
        %2233 = vmatprep.mubr.f32.mxu0 0.0
        %2234 = vmatmul.mubr.f32.gmra.mrb[0].mxu0 %v2018
        %v2235 = vpop.f32.mrb[0].mxu0
        %v2236 = vadd.f32 0.0, %v2235
        %v2237 = vpop.f32.mrb[0].mxu0
        %2238 = vmatprep.mubr.f32.mxu0 0.0
        %2239 = vmatmul.mubr.f32.gmra.mrb[0].mxu0 %v2021
        %v2240 = vpop.f32.mrb[0].mxu0
        %v2241 = vadd.f32 0.0, %v2240
        %v2242 = vpop.f32.mrb[0].mxu0
        %2243 = vmatprep.mubr.f32.mxu0 0.0
        %2244 = vmatmul.mubr.f32.gmra.mrb[0].mxu0 %v2024
        %v2245 = vpop.f32.mrb[0].mxu0
        %v2246 = vadd.f32 0.0, %v2245
        %v2247 = vpop.f32.mrb[0].mxu0
        %2248 = vmatprep.mubr.f32.mxu0 0.0
        %2249 = vmatmul.mubr.f32.gmra.mrb[0].mxu0 %v2027
        %v2250 = vpop.f32.mrb[0].mxu0
        %v2251 = vadd.f32 0.0, %v2250
        %v2252 = vpop.f32.mrb[0].mxu0
        %2253 = vdwg.mxu0
        %vm2254 = vcmp.gt.f32.partialorder %v906, 0.0
        %vm2255 = vcmp.gt.f32.partialorder %v907, 0.0
        %vm2256 = vcmp.gt.f32.partialorder %v908, 0.0
        %vm2257 = vcmp.gt.f32.partialorder %v909, 0.0
        %vm2258 = vcmp.gt.f32.partialorder %v910, 0.0
        %vm2259 = vcmp.gt.f32.partialorder %v911, 0.0
        %vm2260 = vcmp.gt.f32.partialorder %v912, 0.0
        %vm2261 = vcmp.gt.f32.partialorder %v913, 0.0
        %vm2262 = vcmp.gt.f32.partialorder %v914, 0.0
        %vm2263 = vcmp.gt.f32.partialorder %v915, 0.0
        %vm2264 = vcmp.gt.f32.partialorder %v916, 0.0
        %vm2265 = vcmp.gt.f32.partialorder %v917, 0.0
        %vm2266 = vcmp.gt.f32.partialorder %v918, 0.0
        %vm2267 = vcmp.gt.f32.partialorder %v919, 0.0
        %vm2268 = vcmp.gt.f32.partialorder %v920, 0.0
        %vm2269 = vcmp.gt.f32.partialorder %v921, 0.0
        %vm2270 = vcmp.gt.f32.partialorder %v922, 0.0
        %vm2271 = vcmp.gt.f32.partialorder %v923, 0.0
        %vm2272 = vcmp.gt.f32.partialorder %v924, 0.0
        %vm2273 = vcmp.gt.f32.partialorder %v925, 0.0
        %vm2274 = vcmp.gt.f32.partialorder %v926, 0.0
        %vm2275 = vcmp.gt.f32.partialorder %v927, 0.0
        %vm2276 = vcmp.gt.f32.partialorder %v928, 0.0
        %vm2277 = vcmp.gt.f32.partialorder %v929, 0.0
        %vm2278 = vcmp.gt.f32.partialorder %v930, 0.0
        %vm2279 = vcmp.gt.f32.partialorder %v931, 0.0
        %vm2280 = vcmp.gt.f32.partialorder %v932, 0.0
        %vm2281 = vcmp.gt.f32.partialorder %v933, 0.0
        %vm2282 = vcmp.gt.f32.partialorder %v934, 0.0
        %vm2283 = vcmp.gt.f32.partialorder %v935, 0.0
        %vm2284 = vcmp.gt.f32.partialorder %v936, 0.0
        %vm2285 = vcmp.gt.f32.partialorder %v937, 0.0
        %v2286 = vsel %vm2254, %v2096, 0.0
        %v2287 = vsel %vm2255, %v2101, 0.0
        %v2288 = vsel %vm2256, %v2106, 0.0
        %v2289 = vsel %vm2257, %v2111, 0.0
        %v2290 = vsel %vm2258, %v2116, 0.0
        %v2291 = vsel %vm2259, %v2121, 0.0
        %v2292 = vsel %vm2260, %v2126, 0.0
        %v2293 = vsel %vm2261, %v2131, 0.0
        %v2294 = vsel %vm2262, %v2136, 0.0
        %v2295 = vsel %vm2263, %v2141, 0.0
        %v2296 = vsel %vm2264, %v2146, 0.0
        %v2297 = vsel %vm2265, %v2151, 0.0
        %v2298 = vsel %vm2266, %v2156, 0.0
        %v2299 = vsel %vm2267, %v2161, 0.0
        %v2300 = vsel %vm2268, %v2166, 0.0
        %v2301 = vsel %vm2269, %v2171, 0.0
        %v2302 = vsel %vm2270, %v2176, 0.0
        %v2303 = vsel %vm2271, %v2181, 0.0
        %v2304 = vsel %vm2272, %v2186, 0.0
        %v2305 = vsel %vm2273, %v2191, 0.0
        %v2306 = vsel %vm2274, %v2196, 0.0
        %v2307 = vsel %vm2275, %v2201, 0.0
        %v2308 = vsel %vm2276, %v2206, 0.0
        %v2309 = vsel %vm2277, %v2211, 0.0
        %v2310 = vsel %vm2278, %v2216, 0.0
        %v2311 = vsel %vm2279, %v2221, 0.0
        %v2312 = vsel %vm2280, %v2226, 0.0
        %v2313 = vsel %vm2281, %v2231, 0.0
        %v2314 = vsel %vm2282, %v2236, 0.0
        %v2315 = vsel %vm2283, %v2241, 0.0
        %v2316 = vsel %vm2284, %v2246, 0.0
        %v2317 = vsel %vm2285, %v2251, 0.0
        %v2318 = vpack.c.bf16 %v2287, %v2286
        %v2319 = vpack.c.bf16 %v2289, %v2288
        %v2320 = vpack.c.bf16 %v2291, %v2290
        %v2321 = vpack.c.bf16 %v2293, %v2292
        %v2322 = vpack.c.bf16 %v2295, %v2294
        %v2323 = vpack.c.bf16 %v2297, %v2296
        %v2324 = vpack.c.bf16 %v2299, %v2298
        %v2325 = vpack.c.bf16 %v2301, %v2300
        %v2326 = vpack.c.bf16 %v2303, %v2302
        %v2327 = vpack.c.bf16 %v2305, %v2304
        %v2328 = vpack.c.bf16 %v2307, %v2306
        %v2329 = vpack.c.bf16 %v2309, %v2308
        %v2330 = vpack.c.bf16 %v2311, %v2310
        %v2331 = vpack.c.bf16 %v2313, %v2312
        %v2332 = vpack.c.bf16 %v2315, %v2314
        %v2333 = vpack.c.bf16 %v2317, %v2316
        %v2350 = vunpack.c.l.b16 %v1097
        %v2351 = vunpack.c.h.b16 %v1097
        %v2352 = vunpack.c.l.b16 %v1098
        %v2353 = vunpack.c.h.b16 %v1098
        %v2354 = vunpack.c.l.b16 %v1099
        %v2355 = vunpack.c.h.b16 %v1099
        %v2356 = vunpack.c.l.b16 %v1100
        %v2357 = vunpack.c.h.b16 %v1100
        %v2358 = vunpack.c.l.b16 %v1101
        %v2359 = vunpack.c.h.b16 %v1101
        %v2360 = vunpack.c.l.b16 %v1102
        %v2361 = vunpack.c.h.b16 %v1102
        %v2362 = vunpack.c.l.b16 %v1103
        %v2363 = vunpack.c.h.b16 %v1103
        %v2364 = vunpack.c.l.b16 %v1104
        %v2365 = vunpack.c.h.b16 %v1104
        %v2366 = vunpack.c.l.b16 %v1105
        %v2367 = vunpack.c.h.b16 %v1105
        %v2368 = vunpack.c.l.b16 %v1106
        %v2369 = vunpack.c.h.b16 %v1106
        %v2370 = vunpack.c.l.b16 %v1107
        %v2371 = vunpack.c.h.b16 %v1107
        %v2372 = vunpack.c.l.b16 %v1108
        %v2373 = vunpack.c.h.b16 %v1108
        %v2374 = vunpack.c.l.b16 %v1109
        %v2375 = vunpack.c.h.b16 %v1109
        %v2376 = vunpack.c.l.b16 %v1110
        %v2377 = vunpack.c.h.b16 %v1110
        %v2378 = vunpack.c.l.b16 %v1111
        %v2379 = vunpack.c.h.b16 %v1111
        %v2380 = vunpack.c.l.b16 %v1112
        %v2381 = vunpack.c.h.b16 %v1112
        %v2382 = vpack.c.b16 %v2352, %v2350
        %v2383 = vpack.c.b16 %v2353, %v2351
        %v2384 = vpack.c.b16 %v2356, %v2354
        %v2385 = vpack.c.b16 %v2357, %v2355
        %v2386 = vpack.c.b16 %v2360, %v2358
        %v2387 = vpack.c.b16 %v2361, %v2359
        %v2388 = vpack.c.b16 %v2364, %v2362
        %v2389 = vpack.c.b16 %v2365, %v2363
        %v2390 = vpack.c.b16 %v2368, %v2366
        %v2391 = vpack.c.b16 %v2369, %v2367
        %v2392 = vpack.c.b16 %v2372, %v2370
        %v2393 = vpack.c.b16 %v2373, %v2371
        %v2394 = vpack.c.b16 %v2376, %v2374
        %v2395 = vpack.c.b16 %v2377, %v2375
        %v2396 = vpack.c.b16 %v2380, %v2378
        %v2397 = vpack.c.b16 %v2381, %v2379
        %2414 = vmatprep.subr.bf16.mxu0 0
        %2415 = vmatpush1.bf16.msra.mxu0 %v2318
        %2416 = vmatprep.subr.bf16.mxu0 0
        %2417 = vmatpush1.bf16.msra.mxu0 %v2319
        %2418 = vmatprep.subr.bf16.mxu0 0
        %2419 = vmatpush1.bf16.msra.mxu0 %v2320
        %2420 = vmatprep.subr.bf16.mxu0 0
        %2421 = vmatpush1.bf16.msra.mxu0 %v2321
        %2422 = vmatprep.subr.bf16.mxu0 0
        %2423 = vmatpush1.bf16.msra.mxu0 %v2322
        %2424 = vmatprep.subr.bf16.mxu0 0
        %2425 = vmatpush1.bf16.msra.mxu0 %v2323
        %2426 = vmatprep.subr.bf16.mxu0 0
        %2427 = vmatpush1.bf16.msra.mxu0 %v2324
        %2428 = vmatprep.subr.bf16.mxu0 0
        %2429 = vmatpush1.bf16.msra.mxu0 %v2325
        %2430 = vmatprep.subr.bf16.mxu0 0
        %2431 = vmatpush1.bf16.msra.mxu0 %v2326
        %2432 = vmatprep.subr.bf16.mxu0 0
        %2433 = vmatpush1.bf16.msra.mxu0 %v2327
        %2434 = vmatprep.subr.bf16.mxu0 0
        %2435 = vmatpush1.bf16.msra.mxu0 %v2328
        %2436 = vmatprep.subr.bf16.mxu0 0
        %2437 = vmatpush1.bf16.msra.mxu0 %v2329
        %2438 = vmatprep.subr.bf16.mxu0 0
        %2439 = vmatpush1.bf16.msra.mxu0 %v2330
        %2440 = vmatprep.subr.bf16.mxu0 0
        %2441 = vmatpush1.bf16.msra.mxu0 %v2331
        %2442 = vmatprep.subr.bf16.mxu0 0
        %2443 = vmatpush1.bf16.msra.mxu0 %v2332
        %2444 = vmatprep.subr.bf16.mxu0 0
        %2445 = vmatpush1.bf16.msra.mxu0 %v2333
        %2446 = vmatprep.mubr.bf16.mxu0 %v2383
        %2447 = vmatmul.mubr.bf16.gmra.mrb[0].mxu0 %v2382
        %v2448 = vpop.f32.mrb[0].mxu0
        %v2449 = vadd.f32 0.0, %v2448
        %v2450 = vpop.f32.mrb[0].mxu0
        %v2451 = vpop.f32.mrb[0].mxu0
        %v2452 = vadd.f32 0.0, %v2451
        %v2453 = vpop.f32.mrb[0].mxu0
        %2454 = vmatprep.mubr.bf16.mxu0 %v2385
        %2455 = vmatmul.mubr.bf16.gmra.mrb[0].mxu0 %v2384
        %v2456 = vpop.f32.mrb[0].mxu0
        %v2457 = vadd.f32 0.0, %v2456
        %v2458 = vpop.f32.mrb[0].mxu0
        %v2459 = vpop.f32.mrb[0].mxu0
        %v2460 = vadd.f32 0.0, %v2459
        %v2461 = vpop.f32.mrb[0].mxu0
        %2462 = vmatprep.mubr.bf16.mxu0 %v2387
        %2463 = vmatmul.mubr.bf16.gmra.mrb[0].mxu0 %v2386
        %v2464 = vpop.f32.mrb[0].mxu0
        %v2465 = vadd.f32 0.0, %v2464
        %v2466 = vpop.f32.mrb[0].mxu0
        %v2467 = vpop.f32.mrb[0].mxu0
        %v2468 = vadd.f32 0.0, %v2467
        %v2469 = vpop.f32.mrb[0].mxu0
        %2470 = vmatprep.mubr.bf16.mxu0 %v2389
        %2471 = vmatmul.mubr.bf16.gmra.mrb[0].mxu0 %v2388
        %v2472 = vpop.f32.mrb[0].mxu0
        %v2473 = vadd.f32 0.0, %v2472
        %v2474 = vpop.f32.mrb[0].mxu0
        %v2475 = vpop.f32.mrb[0].mxu0
        %v2476 = vadd.f32 0.0, %v2475
        %v2477 = vpop.f32.mrb[0].mxu0
        %2478 = vmatprep.mubr.bf16.mxu0 %v2391
        %2479 = vmatmul.mubr.bf16.gmra.mrb[0].mxu0 %v2390
        %v2480 = vpop.f32.mrb[0].mxu0
        %v2481 = vadd.f32 0.0, %v2480
        %v2482 = vpop.f32.mrb[0].mxu0
        %v2483 = vpop.f32.mrb[0].mxu0
        %v2484 = vadd.f32 0.0, %v2483
        %v2485 = vpop.f32.mrb[0].mxu0
        %2486 = vmatprep.mubr.bf16.mxu0 %v2393
        %2487 = vmatmul.mubr.bf16.gmra.mrb[0].mxu0 %v2392
        %v2488 = vpop.f32.mrb[0].mxu0
        %v2489 = vadd.f32 0.0, %v2488
        %v2490 = vpop.f32.mrb[0].mxu0
        %v2491 = vpop.f32.mrb[0].mxu0
        %v2492 = vadd.f32 0.0, %v2491
        %v2493 = vpop.f32.mrb[0].mxu0
        %2494 = vmatprep.mubr.bf16.mxu0 %v2395
        %2495 = vmatmul.mubr.bf16.gmra.mrb[0].mxu0 %v2394
        %v2496 = vpop.f32.mrb[0].mxu0
        %v2497 = vadd.f32 0.0, %v2496
        %v2498 = vpop.f32.mrb[0].mxu0
        %v2499 = vpop.f32.mrb[0].mxu0
        %v2500 = vadd.f32 0.0, %v2499
        %v2501 = vpop.f32.mrb[0].mxu0
        %2502 = vmatprep.mubr.bf16.mxu0 %v2397
        %2503 = vmatmul.mubr.bf16.gmra.mrb[0].mxu0 %v2396
        %v2504 = vpop.f32.mrb[0].mxu0
        %v2505 = vadd.f32 0.0, %v2504
        %v2506 = vpop.f32.mrb[0].mxu0
        %v2507 = vpop.f32.mrb[0].mxu0
        %v2508 = vadd.f32 0.0, %v2507
        %v2509 = vpop.f32.mrb[0].mxu0
        %2510 = vdwg.mxu0
        %2511 = vst [vmem:[%s504] sm:$0xff] %v2449
        %2512 = vst [vmem:[%s504 + $0x8] sm:$0xff] %v2452
        %2513 = vst [vmem:[%s504 + $0x10] sm:$0xff] %v2457
        %2514 = vst [vmem:[%s504 + $0x18] sm:$0xff] %v2460
        %2515 = vst [vmem:[%s504 + $0x20] sm:$0xff] %v2465
        %2516 = vst [vmem:[%s504 + $0x28] sm:$0xff] %v2468
        %2517 = vst [vmem:[%s504 + $0x30] sm:$0xff] %v2473
        %2518 = vst [vmem:[%s504 + $0x38] sm:$0xff] %v2476
        %2519 = vst [vmem:[%s504 + $0x40] sm:$0xff] %v2481
        %2520 = vst [vmem:[%s504 + $0x48] sm:$0xff] %v2484
        %2521 = vst [vmem:[%s504 + $0x50] sm:$0xff] %v2489
        %2522 = vst [vmem:[%s504 + $0x58] sm:$0xff] %v2492
        %2523 = vst [vmem:[%s504 + $0x60] sm:$0xff] %v2497
        %2524 = vst [vmem:[%s504 + $0x68] sm:$0xff] %v2500
        %2525 = vst [vmem:[%s504 + $0x70] sm:$0xff] %v2505
        %2526 = vst [vmem:[%s504 + $0x78] sm:$0xff] %v2508
        %2527 = vst [vmem:[%s511] sm:$0xff] %v1721
        %2528 = vst [vmem:[%s511 + $0x8] sm:$0xff] %v1726
        %2529 = vst [vmem:[%s511 + $0x10] sm:$0xff] %v1731
        %2530 = vst [vmem:[%s511 + $0x18] sm:$0xff] %v1736
        %2531 = vst [vmem:[%s511 + $0x20] sm:$0xff] %v1741
        %2532 = vst [vmem:[%s511 + $0x28] sm:$0xff] %v1746
        %2533 = vst [vmem:[%s511 + $0x30] sm:$0xff] %v1751
        %2534 = vst [vmem:[%s511 + $0x38] sm:$0xff] %v1756
        %2535 = vst [vmem:[%s511 + $0x40] sm:$0xff] %v1761
        %2536 = vst [vmem:[%s511 + $0x48] sm:$0xff] %v1766
        %2537 = vst [vmem:[%s511 + $0x50] sm:$0xff] %v1771
        %2538 = vst [vmem:[%s511 + $0x58] sm:$0xff] %v1776
        %2539 = vst [vmem:[%s511 + $0x60] sm:$0xff] %v1781
        %2540 = vst [vmem:[%s511 + $0x68] sm:$0xff] %v1786
        %2541 = vst [vmem:[%s511 + $0x70] sm:$0xff] %v1791
        %2542 = vst [vmem:[%s511 + $0x78] sm:$0xff] %v1796
        %2543 = vst.msk [vmem:[%s551] sm:$0xff] %vm1206, %v1368
        %2544 = vst.msk [vmem:[%s551 + $0x8] sm:$0xff] %vm1206, %v1373
        %2545 = vst.msk [vmem:[%s551 + $0x10] sm:$0xff] %vm1206, %v1378
        %2546 = vst.msk [vmem:[%s551 + $0x18] sm:$0xff] %vm1206, %v1383
        %2547 = vst.msk [vmem:[%s551 + $0x20] sm:$0xff] %vm1206, %v1388
        %2548 = vst.msk [vmem:[%s551 + $0x28] sm:$0xff] %vm1206, %v1393
        %2549 = vst.msk [vmem:[%s551 + $0x30] sm:$0xff] %vm1206, %v1398
        %2550 = vst.msk [vmem:[%s551 + $0x38] sm:$0xff] %vm1206, %v1403
        %2551 = vst.msk [vmem:[%s551 + $0x40] sm:$0xff] %vm1206, %v1408
        %2552 = vst.msk [vmem:[%s551 + $0x48] sm:$0xff] %vm1206, %v1413
        %2553 = vst.msk [vmem:[%s551 + $0x50] sm:$0xff] %vm1206, %v1418
        %2554 = vst.msk [vmem:[%s551 + $0x58] sm:$0xff] %vm1206, %v1423
        %2555 = vst.msk [vmem:[%s551 + $0x60] sm:$0xff] %vm1206, %v1428
        %2556 = vst.msk [vmem:[%s551 + $0x68] sm:$0xff] %vm1206, %v1433
        %2557 = vst.msk [vmem:[%s551 + $0x70] sm:$0xff] %vm1206, %v1438
        %2558 = vst.msk [vmem:[%s551 + $0x78] sm:$0xff] %vm1206, %v1443
        %vm2559 = vcmask 24576
        %2560 = vst.msk [vmem:[%s524] sm:$0x1] %vm2559, %v1452
        %s2561 = sand.u32 %s237, 1
        %s2562 = scalar_lea.sflag [#allocation4], %s2561
        %s2563 = sand.u32 %s237, 1
        %s2564 = smul.addr %s2563, 128
        %s2565 = scalar_lea.vmem [#allocation8], %s2564
        %s2566 = sand.u32 %s31, 1
        %s2567 = scalar_lea.sflag [#allocation10], %s2566
        %s2568 = sand.u32 %s263, 1
        %s2569 = smul.addr %s2568, 128
        %s2570 = scalar_lea.vmem [#allocation9], %s2569
        %p2571 = scmp.lt.s32.totalorder %s31, 1
        %s2572 = scalar_select %p2571, %s31, 1
        %s2573 = smul.addr %s2572, 16
        %s2574 = smul.addr %s2573, 8
        %s2575 = scalar_lea.vmem %s10, %s2574
        %s2576 = sand.u32 %s31, 1
        %s2577 = scalar_lea.sflag [#allocation10], %s2576
        %s2578 = sand.u32 %s315, 1
        %s2579 = scalar_lea.vmem [#allocation11], %s2578
        // Predicated region
        $region65: #{tpu_custom_call.1} parent=51 // pred_check
          %p2580 = pneg %p247
        $region66: #{tpu_custom_call.1} parent=51 // pred_check_branch
          %2582 = sbr.rel (%p2580) target = $region68
        $region67: #{tpu_custom_call.1} parent=51 // pred_region
          %s2584 = ssub.s32 2048, 2048
          %2585 = vsyncadd %s2562, %s2584
          %s2586 = smul.addr %s31, 16
          %s2587 = smul.addr %s2586, 128
          %s2588 = scalar_lea.hbm %s8, %s2587
          %s2589 = sshll.u32 %s2565, 4
          %s2590 = int_to_ptr.vmem [resolvable:$true] %s2589
          %2595 = dma.vmem_to_hbm [thread:$0]  %s2590, 2048, %s2588, %s2562, 128, 128, 8
        $region68: #{tpu_custom_call.1} parent=51 // pred_fallthru
          _
        // Predicated region
        $region69: #{tpu_custom_call.1} parent=51 // pred_check
          %p2596 = pneg %p273
        $region70: #{tpu_custom_call.1} parent=51 // pred_check_branch
          %2598 = sbr.rel (%p2596) target = $region72
        $region71: #{tpu_custom_call.1} parent=51 // pred_region
          %s2600 = ssub.s32 2048, 2048
          %2601 = vsyncadd %s2567, %s2600
          %s2602 = smul.addr %s31, 16
          %s2603 = smul.addr %s2602, 128
          %s2604 = scalar_lea.hbm %s9, %s2603
          %s2605 = sshll.u32 %s2570, 4
          %s2606 = int_to_ptr.vmem [resolvable:$true] %s2605
          %2611 = dma.vmem_to_hbm [thread:$0]  %s2606, 2048, %s2604, %s2567, 128, 128, 8
        $region72: #{tpu_custom_call.1} parent=51 // pred_fallthru
          _
        // Predicated region
        $region73: #{tpu_custom_call.1} parent=51 // pred_check
          %p2612 = pneg %p299
        $region74: #{tpu_custom_call.1} parent=51 // pred_check_branch
          %2614 = sbr.rel (%p2612) target = $region76
        $region75: #{tpu_custom_call.1} parent=51 // pred_region
          _
        $region76: #{tpu_custom_call.1} parent=51 // pred_fallthru
          _
        // Predicated region
        $region77: #{tpu_custom_call.1} parent=51 // pred_check
          %p2615 = pneg %p325
        $region78: #{tpu_custom_call.1} parent=51 // pred_check_branch
          %2617 = sbr.rel (%p2615) target = $region80
        $region79: #{tpu_custom_call.1} parent=51 // pred_region
          %s2619 = ssub.s32 16, 16
          %2620 = vsyncadd %s2577, %s2619
          %s2621 = smul.addr %s31, 16
          %s2622 = scalar_lea.hbm %s11, %s2621
          %s2624 = sshll.u32 %s2579, 4
          %s2625 = int_to_ptr.vmem [resolvable:$true] %s2624
          %2627 = dma.vmem_to_hbm [thread:$0]  %s2625, 16, %s2622, %s2577
        $region80: #{tpu_custom_call.1} parent=51 // pred_fallthru
          _
      $region52: #{tpu_custom_call.1} parent=5 // pred_fallthru
        _
      %p2628 = scmp.le.s32.totalorder 2, %s26
      // Predicated region
      $region81: #{tpu_custom_call.1} parent=5 // pred_check
        %p2629 = pneg %p2628
      $region82: #{tpu_custom_call.1} parent=5 // pred_check_branch
        %2631 = sbr.rel (%p2629) target = $region84
      $region83: #{tpu_custom_call.1} parent=5 // pred_region
        %s2632 = ssub.s32 %s26, 2
        // Predicated region
        $region85: #{tpu_custom_call.1} parent=83 // pred_check
          %p2633 = pneg %p253
        $region86: #{tpu_custom_call.1} parent=83 // pred_check_branch
          %2635 = sbr.rel (%p2633) target = $region88
        $region87: #{tpu_custom_call.1} parent=83 // pred_region
          %s2636 = sand.u32 %s238, 1
          %s2637 = scalar_lea.sflag [#allocation4], %s2636
          %s2638 = sand.u32 %s238, 1
          %s2639 = smul.addr %s2638, 128
          %s2640 = scalar_lea.vmem [#allocation8], %s2639
          %2641 = dma.done %s2637, 2048
        $region88: #{tpu_custom_call.1} parent=83 // pred_fallthru
          _
        // Predicated region
        $region89: #{tpu_custom_call.1} parent=83 // pred_check
          %p2642 = pneg %p279
        $region90: #{tpu_custom_call.1} parent=83 // pred_check_branch
          %2644 = sbr.rel (%p2642) target = $region92
        $region91: #{tpu_custom_call.1} parent=83 // pred_region
          %s2645 = sand.u32 %s32, 1
          %s2646 = scalar_lea.sflag [#allocation10], %s2645
          %s2647 = sand.u32 %s264, 1
          %s2648 = smul.addr %s2647, 128
          %s2649 = scalar_lea.vmem [#allocation9], %s2648
          %2650 = dma.done %s2646, 2048
        $region92: #{tpu_custom_call.1} parent=83 // pred_fallthru
          _
        // Predicated region
        $region93: #{tpu_custom_call.1} parent=83 // pred_check
          %p2651 = pneg %p305
        $region94: #{tpu_custom_call.1} parent=83 // pred_check_branch
          %2653 = sbr.rel (%p2651) target = $region96
        $region95: #{tpu_custom_call.1} parent=83 // pred_region
          %p2654 = scmp.lt.s32.totalorder %s32, 1
          %s2655 = scalar_select %p2654, %s32, 1
          %s2656 = smul.addr %s2655, 16
          %s2657 = smul.addr %s2656, 8
          %s2658 = scalar_lea.vmem %s10, %s2657
        $region96: #{tpu_custom_call.1} parent=83 // pred_fallthru
          _
        // Predicated region
        $region97: #{tpu_custom_call.1} parent=83 // pred_check
          %p2659 = pneg %p331
        $region98: #{tpu_custom_call.1} parent=83 // pred_check_branch
          %2661 = sbr.rel (%p2659) target = $region100
        $region99: #{tpu_custom_call.1} parent=83 // pred_region
          %s2662 = sand.u32 %s32, 1
          %s2663 = scalar_lea.sflag [#allocation10], %s2662
          %s2664 = sand.u32 %s316, 1
          %s2665 = scalar_lea.vmem [#allocation11], %s2664
          %2666 = dma.done %s2663, 16
        $region100: #{tpu_custom_call.1} parent=83 // pred_fallthru
          _
      $region84: #{tpu_custom_call.1} parent=5 // pred_fallthru
        _
    $region6: #{tpu_custom_call.1} parent=1 // loop_footer
      %s30 = sadd.s32 1, %s26
    $region7: #{tpu_custom_call.1} parent=1 // loop_footer_branch
      %25 = sbr.rel target = $region3
    $region8: #{tpu_custom_call.1} parent=1 // loop_exit
      _
    %2667 = vsyncpa [#allocation3], 1
    %s2668 = scalar_lea.sflag [#allocation3], 1
    %2669 = vsyncpa %s2668, 1
    %2670 = vsyncpa [#allocation6], 1
    %2671 = vsyncpa [#allocation4], 1
    %s2672 = scalar_lea.sflag [#allocation4], 1
    %2673 = vsyncpa %s2672, 1
    %2674 = vsyncpa [#allocation10], 1
    %s2675 = scalar_lea.sflag [#allocation10], 1
    %2676 = vsyncpa %s2675, 1

</llo_original>
